<compile_context>
chip_gen: v6e
topology: v6e:2x2x1
jax: 0.10.0
libtpu: 0.0.40
codegen_flags: <defaults>
</compile_context>

<pallas_src>
import functools

import jax
import jax.numpy as jnp
from jax.experimental import pallas as pl
from jax.experimental.pallas import tpu as pltpu


# ----------------------------------------------------------------------------
# Fused encoder layer kernel
# ----------------------------------------------------------------------------
def _encoder_layer_kernel(x_ref, bias_ref, ln1_ref, wqkv_ref, wo_ref,
                          ln2_ref, wi_ref, wof_ref, o_ref, *, num_heads):
    # x block: [1, S, D]; bias block: [1, 1, S]; weights full-array (bf16).
    S = x_ref.shape[1]
    D = x_ref.shape[2]
    H = num_heads
    Dh = D // H

    x = x_ref[0].astype(jnp.float32)                      # [S, D]
    bias = bias_ref[0]                                     # [1, S] additive bias

    # --- self-attention sub-layer -------------------------------------------
    # T5 LayerNorm (RMSNorm: no mean subtraction, no bias)
    var = jnp.mean(x * x, axis=-1, keepdims=True)
    h = x * jax.lax.rsqrt(var + 1e-6) * ln1_ref[...]       # (S,D)*(1,D)

    # fused QKV projection: bf16 operands, f32 accumulation
    qkv = jnp.dot(h.astype(jnp.bfloat16), wqkv_ref[...],
                  preferred_element_type=jnp.float32)      # [S, 3D]

    # per-head attention via static lane slices (no reshape/transpose).
    # T5 does NOT scale scores by 1/sqrt(d_head).
    outs = []
    for hh in range(H):
        qh = qkv[:, hh * Dh:(hh + 1) * Dh]                 # [S, Dh]
        kh = qkv[:, D + hh * Dh:D + (hh + 1) * Dh]         # [S, Dh]
        vh = qkv[:, 2 * D + hh * Dh:2 * D + (hh + 1) * Dh]  # [S, Dh]
        s = jax.lax.dot_general(qh, kh, (((1,), (1,)), ((), ())),
                                preferred_element_type=jnp.float32)  # [S, S]
        s = s + bias                                       # [1,S] -> broadcast
        s = s - jnp.max(s, axis=-1, keepdims=True)
        p = jnp.exp(s)
        p = p * pl.reciprocal(jnp.sum(p, axis=-1, keepdims=True), approx=True)
        outs.append(jnp.dot(p, vh, preferred_element_type=jnp.float32))
    attn = jnp.concatenate(outs, axis=-1)                  # [S, D] lane-dense

    x = x + jnp.dot(attn.astype(jnp.bfloat16), wo_ref[...],
                    preferred_element_type=jnp.float32)

    # --- feed-forward sub-layer ---------------------------------------------
    var2 = jnp.mean(x * x, axis=-1, keepdims=True)
    h2 = x * jax.lax.rsqrt(var2 + 1e-6) * ln2_ref[...]
    ff = jnp.dot(h2.astype(jnp.bfloat16), wi_ref[...],
                 preferred_element_type=jnp.float32)       # [S, Dff]
    ff = jnp.maximum(ff, 0.0)
    x = x + jnp.dot(ff.astype(jnp.bfloat16), wof_ref[...],
                    preferred_element_type=jnp.float32)

    o_ref[0] = x.astype(o_ref.dtype)


def encoder_layer(x, bias, lyr, num_heads):
    B, S, D = x.shape
    Dff = lyr["wi"].shape[1]
    kernel = functools.partial(_encoder_layer_kernel, num_heads=num_heads)
    return pl.pallas_call(
        kernel,
        grid=(B,),
        in_specs=[
            pl.BlockSpec((1, S, D), lambda b: (b, 0, 0)),     # x
            pl.BlockSpec((1, 1, S), lambda b: (b, 0, 0)),     # additive bias
            pl.BlockSpec((1, D), lambda b: (0, 0)),           # ln1 (resident)
            pl.BlockSpec((D, 3 * D), lambda b: (0, 0)),       # wqkv (resident)
            pl.BlockSpec((D, D), lambda b: (0, 0)),           # wo
            pl.BlockSpec((1, D), lambda b: (0, 0)),           # ln2
            pl.BlockSpec((D, Dff), lambda b: (0, 0)),         # wi
            pl.BlockSpec((Dff, D), lambda b: (0, 0)),         # wo_ff
        ],
        out_specs=pl.BlockSpec((1, S, D), lambda b: (b, 0, 0)),
        out_shape=jax.ShapeDtypeStruct((B, S, D), jnp.float32),
        compiler_params=pltpu.CompilerParams(
            dimension_semantics=("parallel",)),
    )(x, bias, lyr["ln1"].reshape(1, D), lyr["wqkv"], lyr["wo"],
      lyr["ln2"].reshape(1, D), lyr["wi"], lyr["wo_ff"])


# ----------------------------------------------------------------------------
# Fused epilogue: final rmsnorm + mean-over-seq + Mahalanobis task scoring
# ----------------------------------------------------------------------------
def _epilogue_kernel(x_ref, ln_ref, mflat_ref, covinv_ref, muq_ref,
                     xq_ref, scores_ref, prob_ref, *, num_tasks, num_labels):
    x = x_ref[...].astype(jnp.float32)                     # [B, S, D]
    var = jnp.mean(x * x, axis=-1, keepdims=True)
    xn = x * jax.lax.rsqrt(var + 1e-6)
    # LN weight is per-channel and independent of s, so apply after the mean.
    xq = jnp.mean(xn, axis=1) * ln_ref[...]                # [B, D]
    xq_ref[...] = xq

    # Mahalanobis: dist^2 = q C q^T + mu C mu^T - 2 (q C) mu^T  (C symmetric)
    C = covinv_ref[...].astype(jnp.float32)                # [D, D]
    mflat = mflat_ref[...].astype(jnp.float32)             # [T*L, D]
    qM = jnp.dot(xq, C, preferred_element_type=jnp.float32)           # [B, D]
    q_quad = jnp.sum(xq * qM, axis=-1, keepdims=True)                 # [B, 1]
    cross = jax.lax.dot_general(qM, mflat, (((1,), (1,)), ((), ())),
                                preferred_element_type=jnp.float32)   # [B, T*L]
    dist2 = q_quad + muq_ref[...] - 2.0 * cross
    dist = jnp.sqrt(jnp.maximum(dist2, 0.0))               # [B, T*L]

    # min over classes per task, then softmax(-scores) over tasks
    cols = [jnp.min(dist[:, t * num_labels:(t + 1) * num_labels],
                    axis=-1, keepdims=True) for t in range(num_tasks)]
    scores = jnp.concatenate(cols, axis=-1)                # [B, T]
    scores_ref[...] = scores

    neg = -(scores - jnp.min(scores, axis=-1, keepdims=True))
    e = jnp.exp(neg)
    prob_ref[...] = e * pl.reciprocal(jnp.sum(e, axis=-1, keepdims=True),
                                      approx=True)


def encoder_epilogue(params, x):
    B, S, D = x.shape
    T = params["num_tasks"]
    L = params["num_labels"]
    mflat = params["task_means"].reshape(T * L, D)
    C = params["cov_inv"]
    # per-class quadratic term: parameter-only, precompute once outside.
    mu_quad = jnp.sum((mflat @ C) * mflat, axis=-1).reshape(1, T * L)
    kernel = functools.partial(_epilogue_kernel, num_tasks=T, num_labels=L)
    xq, scores, prob = pl.pallas_call(
        kernel,
        grid=(1,),
        in_specs=[
            pl.BlockSpec((B, S, D), lambda i: (0, 0, 0)),
            pl.BlockSpec((1, D), lambda i: (0, 0)),
            pl.BlockSpec((T * L, D), lambda i: (0, 0)),
            pl.BlockSpec((D, D), lambda i: (0, 0)),
            pl.BlockSpec((1, T * L), lambda i: (0, 0)),
        ],
        out_specs=[
            pl.BlockSpec((B, D), lambda i: (0, 0)),
            pl.BlockSpec((B, T), lambda i: (0, 0)),
            pl.BlockSpec((B, T), lambda i: (0, 0)),
        ],
        out_shape=[
            jax.ShapeDtypeStruct((B, D), jnp.float32),
            jax.ShapeDtypeStruct((B, T), jnp.float32),
            jax.ShapeDtypeStruct((B, T), jnp.float32),
        ],
    )(x, params["final_ln"].reshape(1, D), mflat, C, mu_quad)
    return xq, scores, prob


# ----------------------------------------------------------------------------
# Prefix encoder MLP (get_prompt hot path)
# ----------------------------------------------------------------------------
def _prefix_mlp_kernel(emb_ref, w1_ref, w2_ref, o_ref):
    h = jnp.tanh(jnp.dot(emb_ref[...].astype(jnp.bfloat16), w1_ref[...],
                         preferred_element_type=jnp.float32))
    o_ref[...] = jnp.dot(h.astype(jnp.bfloat16), w2_ref[...],
                         preferred_element_type=jnp.float32).astype(o_ref.dtype)


def pallas_prefix_mlp(emb, w1, w2):
    P, D = emb.shape
    mid = w1.shape[1]
    N = w2.shape[1]
    return pl.pallas_call(
        _prefix_mlp_kernel,
        grid=(1,),
        in_specs=[
            pl.BlockSpec((P, D), lambda i: (0, 0)),
            pl.BlockSpec((D, mid), lambda i: (0, 0)),
            pl.BlockSpec((mid, N), lambda i: (0, 0)),
        ],
        out_specs=pl.BlockSpec((P, N), lambda i: (0, 0)),
        out_shape=jax.ShapeDtypeStruct((P, N), jnp.float32),
    )(emb, w1, w2)


# ----------------------------------------------------------------------------
# Model glue (plain JAX): parameter setup, orchestration
# ----------------------------------------------------------------------------
def init_params(key, *, vocab=64, d_model=128, num_heads=4, d_ff=256,
                num_layers=2, num_tasks=3, num_labels=2, prefix_len=8,
                prefix_mid=128, pad_token_id=0):
    def nrm(k, shape, scale=0.02, dtype=jnp.float32):
        return (scale * jax.random.normal(k, shape, dtype=jnp.float32)).astype(dtype)

    keys = iter(jax.random.split(key, 64))
    layers = []
    for _ in range(num_layers):
        layers.append(dict(
            ln1=jnp.ones((d_model,), jnp.float32),
            wqkv=nrm(next(keys), (d_model, 3 * d_model), dtype=jnp.bfloat16),
            wo=nrm(next(keys), (d_model, d_model), dtype=jnp.bfloat16),
            ln2=jnp.ones((d_model,), jnp.float32),
            wi=nrm(next(keys), (d_model, d_ff), dtype=jnp.bfloat16),
            wo_ff=nrm(next(keys), (d_ff, d_model), dtype=jnp.bfloat16),
        ))
    params = dict(
        vocab=vocab, d_model=d_model, num_heads=num_heads, d_ff=d_ff,
        num_layers=num_layers, num_tasks=num_tasks, num_labels=num_labels,
        prefix_len=prefix_len, pad_token_id=pad_token_id,
        embed_tokens=nrm(next(keys), (vocab, d_model), scale=1.0),
        layers=layers,
        final_ln=jnp.ones((d_model,), jnp.float32),
        # task_identify_epi state (query_size x query_size cov_inv as in __init__)
        task_means=nrm(next(keys), (num_tasks, num_labels, d_model), scale=1.0),
        cov_inv=jnp.eye(d_model, dtype=jnp.float32),
        # PrefixContinualMTLEncoder-style params (per-task prefix embeddings + MLP)
        prefix_emb=nrm(next(keys), (num_tasks, prefix_len, d_model), scale=1.0),
        prefix_w1=nrm(next(keys), (d_model, prefix_mid), dtype=jnp.bfloat16),
        prefix_w2=nrm(next(keys), (prefix_mid, num_layers * 2 * d_model),
                      dtype=jnp.bfloat16),
    )
    return params


def t5_encoder(params, inputs_embeds, attention_mask):
    """Simplified frozen T5 encoder (query_encoder): one fused kernel per layer."""
    B, S, _ = inputs_embeds.shape
    H = params["num_heads"]
    # mask -> additive bias, computed once per forward (hoisted out of kernels)
    bias = jnp.where(attention_mask > 0, 0.0, -1e9).astype(jnp.float32)
    bias = bias.reshape(B, 1, S)
    x = inputs_embeds.astype(jnp.float32)
    for lyr in params["layers"]:
        x = encoder_layer(x, bias, lyr, H)
    return x  # final rmsnorm is fused into the epilogue kernel


def get_prompt(params, batch_size, task_id):
    """PrefixContinualMTLEncoder-style prompt generation + past_prompt packaging."""
    P = params["prefix_len"]
    D = params["d_model"]
    H = params["num_heads"]
    Dh = D // H
    L = params["num_layers"]
    emb = params["prefix_emb"][task_id]                                  # [P, D]
    kv = pallas_prefix_mlp(emb, params["prefix_w1"], params["prefix_w2"])  # [P, L*2*D]
    kv = kv.reshape(P, L, 2, H, Dh)
    kv = jnp.transpose(kv, (1, 2, 3, 0, 4))                              # [L,2,H,P,Dh]
    kv = jnp.broadcast_to(kv[:, :, None], (L, 2, batch_size, H, P, Dh))
    pad_mask = jnp.zeros((batch_size, P), dtype=bool)
    past_prompt = []
    for l in range(L):
        prompt = {"prev_key": kv[l, 0],
                  "prev_value": kv[l, 1],
                  "prev_key_padding_mask": pad_mask}
        past_prompt.append({"encoder_prompt": prompt,
                            "decoder_prompt": prompt,
                            "cross_attention_prompt": prompt})
    match_loss = jnp.float32(0.0)   # non-compose_prompts branch: match_loss = 0
    return past_prompt, match_loss


def forward(params, batch, task_id, train=False, final=True, id_pred_on=True):
    source_ids = batch["source_ids"]
    attention_mask = batch["source_mask"]
    target_ids = batch["target_ids"]

    # labels[labels == pad_token_id] = -100
    labels = jnp.where(target_ids == params["pad_token_id"], -100, target_ids)

    # inputs_embeds = encoder.embed_tokens(source_ids)
    inputs_embeds = jnp.take(params["embed_tokens"], source_ids, axis=0)
    batch_size = inputs_embeds.shape[0]

    # x_embed = query_encoder(...).last_hidden_state ; x_query = process_query(...)
    # final rmsnorm + mean over seq + _get_epi_ids scoring are fused in one kernel
    x_pre = t5_encoder(params, inputs_embeds, attention_mask)
    x_query, scores, prob = encoder_epilogue(params, x_pre)

    pred_ids = None
    if final and id_pred_on:
        pred_ids = jnp.argmin(scores, axis=-1)             # _get_epi_ids ids
    else:
        prob = None

    past_prompt, match_loss = get_prompt(params, batch_size, task_id)

    # TODO(synk): self.model(input_ids=..., past_prompt=...) loss / generate (full
    # pretrained T5 decoder) is not reproduced; return the computed pieces instead.
    return dict(x_query=x_query, labels=labels, pred_ids=pred_ids, prob=prob,
                past_prompt=past_prompt, match_loss=match_loss)


# ----------------------------------------------------------------------------
# main
# ----------------------------------------------------------------------------
if __name__ == "__main__":
    key = jax.random.PRNGKey(0)
    pkey, dkey1, dkey2 = jax.random.split(key, 3)

    B, S, TGT = 2, 8, 6
    params = init_params(pkey)

    source_ids = jax.random.randint(dkey1, (B, S), 1, params["vocab"], dtype=jnp.int32)
    source_mask = jnp.array([[1] * S, [1] * (S - 2) + [0, 0]], dtype=jnp.int32)
    target_ids = jax.random.randint(dkey2, (B, TGT), 0, params["vocab"], dtype=jnp.int32)
    batch = {"source_ids": source_ids, "source_mask": source_mask,
             "target_ids": target_ids}

    out = forward(params, batch, task_id=1, train=False, final=True, id_pred_on=True)
    jax.block_until_ready(out)
    print("KERNEL_OK")
</pallas_src>

<mosaic_0001>
module attributes {stable_mosaic.version = 11 : i64} {
  func.func @_encoder_layer_kernel(%arg0: i32, %arg1: memref<1x8x128xf32, #tpu.memory_space<vmem>>, %arg2: memref<1x1x8xf32, #tpu.memory_space<vmem>>, %arg3: memref<1x128xf32, #tpu.memory_space<vmem>>, %arg4: memref<128x384xbf16, #tpu.memory_space<vmem>>, %arg5: memref<128x128xbf16, #tpu.memory_space<vmem>>, %arg6: memref<1x128xf32, #tpu.memory_space<vmem>>, %arg7: memref<128x256xbf16, #tpu.memory_space<vmem>>, %arg8: memref<256x128xbf16, #tpu.memory_space<vmem>>, %arg9: memref<1x8x128xf32, #tpu.memory_space<vmem>>) attributes {dimension_semantics = [#tpu.dimension_semantics<parallel>], iteration_bounds = array<i64: 2>, scalar_prefetch = 0 : i64, scratch_operands = 0 : i64, tpu.core_type = #tpu.core_type<tc>, window_params = [{transform_indices = @transform_0, window_bounds = array<i64: 1, 8, 128>}, {transform_indices = @transform_1, window_bounds = array<i64: 1, 1, 8>}, {pipeline_mode = #tpu.pipeline_mode<synchronous>, transform_indices = @transform_2, window_bounds = array<i64: 1, 128>}, {pipeline_mode = #tpu.pipeline_mode<synchronous>, transform_indices = @transform_3, window_bounds = array<i64: 128, 384>}, {pipeline_mode = #tpu.pipeline_mode<synchronous>, transform_indices = @transform_4, window_bounds = array<i64: 128, 128>}, {pipeline_mode = #tpu.pipeline_mode<synchronous>, transform_indices = @transform_5, window_bounds = array<i64: 1, 128>}, {pipeline_mode = #tpu.pipeline_mode<synchronous>, transform_indices = @transform_6, window_bounds = array<i64: 128, 256>}, {pipeline_mode = #tpu.pipeline_mode<synchronous>, transform_indices = @transform_7, window_bounds = array<i64: 256, 128>}, {transform_indices = @transform_8, window_bounds = array<i64: 1, 8, 128>}]} {
    %c0 = arith.constant 0 : index
    %c0_0 = arith.constant 0 : index
    %c0_1 = arith.constant 0 : index
    %0 = vector.load %arg1[%c0, %c0_0, %c0_1] : memref<1x8x128xf32, #tpu.memory_space<vmem>>, vector<1x8x128xf32>
    %1 = vector.shape_cast %0 : vector<1x8x128xf32> to vector<8x128xf32>
    %c0_2 = arith.constant 0 : index
    %c0_3 = arith.constant 0 : index
    %c0_4 = arith.constant 0 : index
    %2 = vector.load %arg2[%c0_2, %c0_3, %c0_4] : memref<1x1x8xf32, #tpu.memory_space<vmem>>, vector<1x1x8xf32>
    %3 = vector.shape_cast %2 : vector<1x1x8xf32> to vector<1x8xf32>
    %4 = arith.mulf %1, %1 : vector<8x128xf32>
    %cst = arith.constant dense<0.000000e+00> : vector<8xf32>
    %5 = vector.multi_reduction <add>, %4, %cst [1] : vector<8x128xf32> to vector<8xf32>
    %6 = vector.shape_cast %5 : vector<8xf32> to vector<8x1xf32>
    %cst_5 = arith.constant 1.280000e+02 : f32
    %7 = vector.broadcast %cst_5 : f32 to vector<8x1xf32>
    %8 = arith.divf %6, %7 : vector<8x1xf32>
    %cst_6 = arith.constant 9.99999997E-7 : f32
    %9 = vector.broadcast %cst_6 : f32 to vector<8x1xf32>
    %10 = arith.addf %8, %9 : vector<8x1xf32>
    %11 = math.rsqrt %10 : vector<8x1xf32>
    %12 = vector.broadcast %11 : vector<8x1xf32> to vector<8x128xf32>
    %13 = arith.mulf %1, %12 : vector<8x128xf32>
    %c0_7 = arith.constant 0 : index
    %c0_8 = arith.constant 0 : index
    %14 = vector.load %arg3[%c0_7, %c0_8] : memref<1x128xf32, #tpu.memory_space<vmem>>, vector<1x128xf32>
    %15 = vector.broadcast %14 : vector<1x128xf32> to vector<8x128xf32>
    %16 = arith.mulf %13, %15 : vector<8x128xf32>
    %17 = arith.truncf %16 : vector<8x128xf32> to vector<8x128xbf16>
    %c0_9 = arith.constant 0 : index
    %c0_10 = arith.constant 0 : index
    %18 = vector.load %arg4[%c0_9, %c0_10] : memref<128x384xbf16, #tpu.memory_space<vmem>>, vector<128x384xbf16>
    %cst_11 = arith.constant dense<0.000000e+00> : vector<8x384xf32>
    %19 = tpu.matmul %17, %18, %cst_11 {dimension_numbers = #tpu.dot_dimension_numbers<[1], [0], [0], [1], [0, 0, 1, 1], [], []>} : vector<8x128xbf16>, vector<128x384xbf16>, vector<8x384xf32> -> vector<8x384xf32>
    %20 = vector.extract_strided_slice %19 {offsets = [0, 0], sizes = [8, 32], strides = [1, 1]} : vector<8x384xf32> to vector<8x32xf32>
    %21 = vector.extract_strided_slice %19 {offsets = [0, 128], sizes = [8, 32], strides = [1, 1]} : vector<8x384xf32> to vector<8x32xf32>
    %22 = vector.extract_strided_slice %19 {offsets = [0, 256], sizes = [8, 32], strides = [1, 1]} : vector<8x384xf32> to vector<8x32xf32>
    %cst_12 = arith.constant dense<0.000000e+00> : vector<8x8xf32>
    %23 = tpu.matmul %20, %21, %cst_12 {dimension_numbers = #tpu.dot_dimension_numbers<[1], [1], [0], [0], [0, 0, 1, 0], [], []>} : vector<8x32xf32>, vector<8x32xf32>, vector<8x8xf32> -> vector<8x8xf32>
    %24 = vector.broadcast %3 : vector<1x8xf32> to vector<8x8xf32>
    %25 = arith.addf %23, %24 : vector<8x8xf32>
    %cst_13 = arith.constant dense<0xFF800000> : vector<8xf32>
    %26 = vector.multi_reduction <maximumf>, %25, %cst_13 [1] : vector<8x8xf32> to vector<8xf32>
    %27 = vector.shape_cast %26 : vector<8xf32> to vector<8x1xf32>
    %28 = vector.broadcast %27 : vector<8x1xf32> to vector<8x8xf32>
    %29 = arith.subf %25, %28 : vector<8x8xf32>
    %30 = math.exp %29 : vector<8x8xf32>
    %cst_14 = arith.constant dense<0.000000e+00> : vector<8xf32>
    %31 = vector.multi_reduction <add>, %30, %cst_14 [1] : vector<8x8xf32> to vector<8xf32>
    %32 = vector.shape_cast %31 : vector<8xf32> to vector<8x1xf32>
    %33 = tpu.reciprocal %32 {approx = true} : vector<8x1xf32> -> vector<8x1xf32>
    %34 = vector.broadcast %33 : vector<8x1xf32> to vector<8x8xf32>
    %35 = arith.mulf %30, %34 : vector<8x8xf32>
    %cst_15 = arith.constant dense<0.000000e+00> : vector<8x32xf32>
    %36 = tpu.matmul %35, %22, %cst_15 {dimension_numbers = #tpu.dot_dimension_numbers<[1], [0], [0], [1], [0, 0, 1, 1], [], []>} : vector<8x8xf32>, vector<8x32xf32>, vector<8x32xf32> -> vector<8x32xf32>
    %37 = vector.extract_strided_slice %19 {offsets = [0, 32], sizes = [8, 32], strides = [1, 1]} : vector<8x384xf32> to vector<8x32xf32>
    %38 = vector.extract_strided_slice %19 {offsets = [0, 160], sizes = [8, 32], strides = [1, 1]} : vector<8x384xf32> to vector<8x32xf32>
    %39 = vector.extract_strided_slice %19 {offsets = [0, 288], sizes = [8, 32], strides = [1, 1]} : vector<8x384xf32> to vector<8x32xf32>
    %cst_16 = arith.constant dense<0.000000e+00> : vector<8x8xf32>
    %40 = tpu.matmul %37, %38, %cst_16 {dimension_numbers = #tpu.dot_dimension_numbers<[1], [1], [0], [0], [0, 0, 1, 0], [], []>} : vector<8x32xf32>, vector<8x32xf32>, vector<8x8xf32> -> vector<8x8xf32>
    %41 = vector.broadcast %3 : vector<1x8xf32> to vector<8x8xf32>
    %42 = arith.addf %40, %41 : vector<8x8xf32>
    %cst_17 = arith.constant dense<0xFF800000> : vector<8xf32>
    %43 = vector.multi_reduction <maximumf>, %42, %cst_17 [1] : vector<8x8xf32> to vector<8xf32>
    %44 = vector.shape_cast %43 : vector<8xf32> to vector<8x1xf32>
    %45 = vector.broadcast %44 : vector<8x1xf32> to vector<8x8xf32>
    %46 = arith.subf %42, %45 : vector<8x8xf32>
    %47 = math.exp %46 : vector<8x8xf32>
    %cst_18 = arith.constant dense<0.000000e+00> : vector<8xf32>
    %48 = vector.multi_reduction <add>, %47, %cst_18 [1] : vector<8x8xf32> to vector<8xf32>
    %49 = vector.shape_cast %48 : vector<8xf32> to vector<8x1xf32>
    %50 = tpu.reciprocal %49 {approx = true} : vector<8x1xf32> -> vector<8x1xf32>
    %51 = vector.broadcast %50 : vector<8x1xf32> to vector<8x8xf32>
    %52 = arith.mulf %47, %51 : vector<8x8xf32>
    %cst_19 = arith.constant dense<0.000000e+00> : vector<8x32xf32>
    %53 = tpu.matmul %52, %39, %cst_19 {dimension_numbers = #tpu.dot_dimension_numbers<[1], [0], [0], [1], [0, 0, 1, 1], [], []>} : vector<8x8xf32>, vector<8x32xf32>, vector<8x32xf32> -> vector<8x32xf32>
    %54 = vector.extract_strided_slice %19 {offsets = [0, 64], sizes = [8, 32], strides = [1, 1]} : vector<8x384xf32> to vector<8x32xf32>
    %55 = vector.extract_strided_slice %19 {offsets = [0, 192], sizes = [8, 32], strides = [1, 1]} : vector<8x384xf32> to vector<8x32xf32>
    %56 = vector.extract_strided_slice %19 {offsets = [0, 320], sizes = [8, 32], strides = [1, 1]} : vector<8x384xf32> to vector<8x32xf32>
    %cst_20 = arith.constant dense<0.000000e+00> : vector<8x8xf32>
    %57 = tpu.matmul %54, %55, %cst_20 {dimension_numbers = #tpu.dot_dimension_numbers<[1], [1], [0], [0], [0, 0, 1, 0], [], []>} : vector<8x32xf32>, vector<8x32xf32>, vector<8x8xf32> -> vector<8x8xf32>
    %58 = vector.broadcast %3 : vector<1x8xf32> to vector<8x8xf32>
    %59 = arith.addf %57, %58 : vector<8x8xf32>
    %cst_21 = arith.constant dense<0xFF800000> : vector<8xf32>
    %60 = vector.multi_reduction <maximumf>, %59, %cst_21 [1] : vector<8x8xf32> to vector<8xf32>
    %61 = vector.shape_cast %60 : vector<8xf32> to vector<8x1xf32>
    %62 = vector.broadcast %61 : vector<8x1xf32> to vector<8x8xf32>
    %63 = arith.subf %59, %62 : vector<8x8xf32>
    %64 = math.exp %63 : vector<8x8xf32>
    %cst_22 = arith.constant dense<0.000000e+00> : vector<8xf32>
    %65 = vector.multi_reduction <add>, %64, %cst_22 [1] : vector<8x8xf32> to vector<8xf32>
    %66 = vector.shape_cast %65 : vector<8xf32> to vector<8x1xf32>
    %67 = tpu.reciprocal %66 {approx = true} : vector<8x1xf32> -> vector<8x1xf32>
    %68 = vector.broadcast %67 : vector<8x1xf32> to vector<8x8xf32>
    %69 = arith.mulf %64, %68 : vector<8x8xf32>
    %cst_23 = arith.constant dense<0.000000e+00> : vector<8x32xf32>
    %70 = tpu.matmul %69, %56, %cst_23 {dimension_numbers = #tpu.dot_dimension_numbers<[1], [0], [0], [1], [0, 0, 1, 1], [], []>} : vector<8x8xf32>, vector<8x32xf32>, vector<8x32xf32> -> vector<8x32xf32>
    %71 = vector.extract_strided_slice %19 {offsets = [0, 96], sizes = [8, 32], strides = [1, 1]} : vector<8x384xf32> to vector<8x32xf32>
    %72 = vector.extract_strided_slice %19 {offsets = [0, 224], sizes = [8, 32], strides = [1, 1]} : vector<8x384xf32> to vector<8x32xf32>
    %73 = vector.extract_strided_slice %19 {offsets = [0, 352], sizes = [8, 32], strides = [1, 1]} : vector<8x384xf32> to vector<8x32xf32>
    %cst_24 = arith.constant dense<0.000000e+00> : vector<8x8xf32>
    %74 = tpu.matmul %71, %72, %cst_24 {dimension_numbers = #tpu.dot_dimension_numbers<[1], [1], [0], [0], [0, 0, 1, 0], [], []>} : vector<8x32xf32>, vector<8x32xf32>, vector<8x8xf32> -> vector<8x8xf32>
    %75 = vector.broadcast %3 : vector<1x8xf32> to vector<8x8xf32>
    %76 = arith.addf %74, %75 : vector<8x8xf32>
    %cst_25 = arith.constant dense<0xFF800000> : vector<8xf32>
    %77 = vector.multi_reduction <maximumf>, %76, %cst_25 [1] : vector<8x8xf32> to vector<8xf32>
    %78 = vector.shape_cast %77 : vector<8xf32> to vector<8x1xf32>
    %79 = vector.broadcast %78 : vector<8x1xf32> to vector<8x8xf32>
    %80 = arith.subf %76, %79 : vector<8x8xf32>
    %81 = math.exp %80 : vector<8x8xf32>
    %cst_26 = arith.constant dense<0.000000e+00> : vector<8xf32>
    %82 = vector.multi_reduction <add>, %81, %cst_26 [1] : vector<8x8xf32> to vector<8xf32>
    %83 = vector.shape_cast %82 : vector<8xf32> to vector<8x1xf32>
    %84 = tpu.reciprocal %83 {approx = true} : vector<8x1xf32> -> vector<8x1xf32>
    %85 = vector.broadcast %84 : vector<8x1xf32> to vector<8x8xf32>
    %86 = arith.mulf %81, %85 : vector<8x8xf32>
    %cst_27 = arith.constant dense<0.000000e+00> : vector<8x32xf32>
    %87 = tpu.matmul %86, %73, %cst_27 {dimension_numbers = #tpu.dot_dimension_numbers<[1], [0], [0], [1], [0, 0, 1, 1], [], []>} : vector<8x8xf32>, vector<8x32xf32>, vector<8x32xf32> -> vector<8x32xf32>
    %88 = tpu.concatenate %36, %53, %70, %87 in 1 : vector<8x32xf32>, vector<8x32xf32>, vector<8x32xf32>, vector<8x32xf32> -> vector<8x128xf32>
    %89 = arith.truncf %88 : vector<8x128xf32> to vector<8x128xbf16>
    %c0_28 = arith.constant 0 : index
    %c0_29 = arith.constant 0 : index
    %90 = vector.load %arg5[%c0_28, %c0_29] : memref<128x128xbf16, #tpu.memory_space<vmem>>, vector<128x128xbf16>
    %cst_30 = arith.constant dense<0.000000e+00> : vector<8x128xf32>
    %91 = tpu.matmul %89, %90, %cst_30 {dimension_numbers = #tpu.dot_dimension_numbers<[1], [0], [0], [1], [0, 0, 1, 1], [], []>} : vector<8x128xbf16>, vector<128x128xbf16>, vector<8x128xf32> -> vector<8x128xf32>
    %92 = arith.addf %1, %91 : vector<8x128xf32>
    %93 = arith.mulf %92, %92 : vector<8x128xf32>
    %cst_31 = arith.constant dense<0.000000e+00> : vector<8xf32>
    %94 = vector.multi_reduction <add>, %93, %cst_31 [1] : vector<8x128xf32> to vector<8xf32>
    %95 = vector.shape_cast %94 : vector<8xf32> to vector<8x1xf32>
    %cst_32 = arith.constant 1.280000e+02 : f32
    %96 = vector.broadcast %cst_32 : f32 to vector<8x1xf32>
    %97 = arith.divf %95, %96 : vector<8x1xf32>
    %cst_33 = arith.constant 9.99999997E-7 : f32
    %98 = vector.broadcast %cst_33 : f32 to vector<8x1xf32>
    %99 = arith.addf %97, %98 : vector<8x1xf32>
    %100 = math.rsqrt %99 : vector<8x1xf32>
    %101 = vector.broadcast %100 : vector<8x1xf32> to vector<8x128xf32>
    %102 = arith.mulf %92, %101 : vector<8x128xf32>
    %c0_34 = arith.constant 0 : index
    %c0_35 = arith.constant 0 : index
    %103 = vector.load %arg6[%c0_34, %c0_35] : memref<1x128xf32, #tpu.memory_space<vmem>>, vector<1x128xf32>
    %104 = vector.broadcast %103 : vector<1x128xf32> to vector<8x128xf32>
    %105 = arith.mulf %102, %104 : vector<8x128xf32>
    %106 = arith.truncf %105 : vector<8x128xf32> to vector<8x128xbf16>
    %c0_36 = arith.constant 0 : index
    %c0_37 = arith.constant 0 : index
    %107 = vector.load %arg7[%c0_36, %c0_37] : memref<128x256xbf16, #tpu.memory_space<vmem>>, vector<128x256xbf16>
    %cst_38 = arith.constant dense<0.000000e+00> : vector<8x256xf32>
    %108 = tpu.matmul %106, %107, %cst_38 {dimension_numbers = #tpu.dot_dimension_numbers<[1], [0], [0], [1], [0, 0, 1, 1], [], []>} : vector<8x128xbf16>, vector<128x256xbf16>, vector<8x256xf32> -> vector<8x256xf32>
    %cst_39 = arith.constant 0.000000e+00 : f32
    %109 = vector.broadcast %cst_39 : f32 to vector<8x256xf32>
    %110 = arith.maximumf %108, %109 : vector<8x256xf32>
    %111 = arith.truncf %110 : vector<8x256xf32> to vector<8x256xbf16>
    %c0_40 = arith.constant 0 : index
    %c0_41 = arith.constant 0 : index
    %112 = vector.load %arg8[%c0_40, %c0_41] : memref<256x128xbf16, #tpu.memory_space<vmem>>, vector<256x128xbf16>
    %cst_42 = arith.constant dense<0.000000e+00> : vector<8x128xf32>
    %113 = tpu.matmul %111, %112, %cst_42 {dimension_numbers = #tpu.dot_dimension_numbers<[1], [0], [0], [1], [0, 0, 1, 1], [], []>} : vector<8x256xbf16>, vector<256x128xbf16>, vector<8x128xf32> -> vector<8x128xf32>
    %114 = arith.addf %92, %113 : vector<8x128xf32>
    %c0_43 = arith.constant 0 : index
    %c0_44 = arith.constant 0 : index
    %c0_45 = arith.constant 0 : index
    %115 = vector.load %arg9[%c0_43, %c0_44, %c0_45] : memref<1x8x128xf32, #tpu.memory_space<vmem>>, vector<1x8x128xf32>
    %116 = vector.shape_cast %115 : vector<1x8x128xf32> to vector<8x128xf32>
    %117 = vector.shape_cast %114 : vector<8x128xf32> to vector<1x8x128xf32>
    tpu.vector_store %arg9[%c0_43, %c0_44, %c0_45], %117 {strides = array<i32>} : memref<1x8x128xf32, #tpu.memory_space<vmem>>, vector<1x8x128xf32>,
    return
  }
  func.func @transform_0(%arg0: i32) -> (i32, i32, i32) {
    %c0_i32 = arith.constant 0 : i32
    %c0_i32_0 = arith.constant 0 : i32
    %c0_i32_1 = arith.constant 0 : i32
    return %arg0, %c0_i32, %c0_i32_0 : i32, i32, i32
  }
  func.func @transform_1(%arg0: i32) -> (i32, i32, i32) {
    %c0_i32 = arith.constant 0 : i32
    %c0_i32_0 = arith.constant 0 : i32
    %c0_i32_1 = arith.constant 0 : i32
    return %arg0, %c0_i32, %c0_i32_0 : i32, i32, i32
  }
  func.func @transform_2(%arg0: i32) -> (i32, i32) {
    %c0_i32 = arith.constant 0 : i32
    %c0_i32_0 = arith.constant 0 : i32
    %c0_i32_1 = arith.constant 0 : i32
    return %c0_i32, %c0_i32_0 : i32, i32
  }
  func.func @transform_3(%arg0: i32) -> (i32, i32) {
    %c0_i32 = arith.constant 0 : i32
    %c0_i32_0 = arith.constant 0 : i32
    %c0_i32_1 = arith.constant 0 : i32
    return %c0_i32, %c0_i32_0 : i32, i32
  }
  func.func @transform_4(%arg0: i32) -> (i32, i32) {
    %c0_i32 = arith.constant 0 : i32
    %c0_i32_0 = arith.constant 0 : i32
    %c0_i32_1 = arith.constant 0 : i32
    return %c0_i32, %c0_i32_0 : i32, i32
  }
  func.func @transform_5(%arg0: i32) -> (i32, i32) {
    %c0_i32 = arith.constant 0 : i32
    %c0_i32_0 = arith.constant 0 : i32
    %c0_i32_1 = arith.constant 0 : i32
    return %c0_i32, %c0_i32_0 : i32, i32
  }
  func.func @transform_6(%arg0: i32) -> (i32, i32) {
    %c0_i32 = arith.constant 0 : i32
    %c0_i32_0 = arith.constant 0 : i32
    %c0_i32_1 = arith.constant 0 : i32
    return %c0_i32, %c0_i32_0 : i32, i32
  }
  func.func @transform_7(%arg0: i32) -> (i32, i32) {
    %c0_i32 = arith.constant 0 : i32
    %c0_i32_0 = arith.constant 0 : i32
    %c0_i32_1 = arith.constant 0 : i32
    return %c0_i32, %c0_i32_0 : i32, i32
  }
  func.func @transform_8(%arg0: i32) -> (i32, i32, i32) {
    %c0_i32 = arith.constant 0 : i32
    %c0_i32_0 = arith.constant 0 : i32
    %c0_i32_1 = arith.constant 0 : i32
    return %arg0, %c0_i32, %c0_i32_0 : i32, i32, i32
  }
}

</mosaic_0001>

<llo_original>
// kernel: tpu_custom_call.1
$region0: #{tpu_custom_call.1}
  #allocation0 [shape = 'u32[]', space=smem, size = 0x4, offset = 0x4, fixed_abs, tag = 'smem constant byte address 0x4 - core index']
  #allocation1 [shape = 'u32[144,128]{1,0:T(1,128)}', space=vmem, size = 0x12000, scoped, tag = 'internal scratch']
  %s0 = inlined_call_operand.hbm [shape: f32[2,8,128], index: 0, kind: input, shape index: {}]
  %s1 = inlined_call_operand.hbm [shape: f32[2,1,8], index: 1, kind: input, shape index: {}]
  %s2 = inlined_call_operand.vmem [shape: f32[1,128], index: 2, kind: input, shape index: {}]
  %s3 = inlined_call_operand.hbm [shape: bf16[128,384], index: 3, kind: input, shape index: {}]
  %s4 = inlined_call_operand.hbm [shape: bf16[128,128], index: 4, kind: input, shape index: {}]
  %s5 = inlined_call_operand.vmem [shape: f32[1,128], index: 5, kind: input, shape index: {}]
  %s6 = inlined_call_operand.hbm [shape: bf16[128,256], index: 6, kind: input, shape index: {}]
  %s7 = inlined_call_operand.hbm [shape: bf16[256,128], index: 7, kind: input, shape index: {}]
  %s8 = inlined_call_operand.hbm [shape: f32[2,8,128], index: 8, kind: output, shape index: {}]
  %s9 = sld [smem:[#allocation0]]
  $region89: #{tpu_custom_call.1} parent=0
    _
  %s11 = ssub.s32 1, %s9
  %s12 = scalar_select 0, %s11, %s9
  $region1: #{tpu_custom_call.1} parent=0
    #allocation2 [shape = 'u8[8192]{0}', space=vmem, size = 0x2000, scoped, tag = 'input window, operand 0']
    #allocation3 [shape = 's32[2]{0}', space=sflag, size = 0x8, scoped, tag = 'scoped memory for tpu_custom_call.1']
    #allocation4 [shape = 's32[2]{0}', space=sflag, size = 0x8, scoped, tag = 'scoped memory for tpu_custom_call.1']
    #allocation5 [shape = 'u8[1024]{0}', space=vmem, size = 0x400, scoped, tag = 'input window, operand 1']
    #allocation6 [shape = 's32[2]{0}', space=sflag, size = 0x8, scoped, tag = 'scoped memory for tpu_custom_call.1']
    #allocation7 [shape = 'u8[98304]{0}', space=vmem, size = 0x18000, scoped, tag = 'input window, operand 3, single buffered']
    #allocation8 [shape = 'u8[32768]{0}', space=vmem, size = 0x8000, scoped, tag = 'input window, operand 4, single buffered']
    #allocation9 [shape = 's32[1]{0}', space=sflag, size = 0x4, scoped, tag = 'scoped memory for tpu_custom_call.1']
    #allocation10 [shape = 'u8[65536]{0}', space=vmem, size = 0x10000, scoped, tag = 'input window, operand 6, single buffered']
    #allocation11 [shape = 'u8[65536]{0}', space=vmem, size = 0x10000, scoped, tag = 'input window, operand 7, single buffered']
    #allocation12 [shape = 's32[1]{0}', space=sflag, size = 0x4, scoped, tag = 'scoped memory for tpu_custom_call.1']
    #allocation13 [shape = 'u8[8192]{0}', space=vmem, size = 0x2000, scoped, tag = 'output window, operand 0']
    %13 = vsyncpa [#allocation3], 0
    %s14 = scalar_lea.sflag [#allocation3], 1
    %15 = vsyncpa %s14, 0
    %16 = vsyncpa [#allocation6], 0
    %s17 = scalar_lea.sflag [#allocation6], 1
    %18 = vsyncpa %s17, 0
    %19 = vsyncpa [#allocation9], 0
    %20 = vsyncpa [#allocation12], 0
    %21 = vsyncpa [#allocation4], 0
    %s22 = scalar_lea.sflag [#allocation4], 1
    %23 = vsyncpa %s22, 0
    loop: start=0, step=1, limit=4
    $region2: #{tpu_custom_call.1} parent=1 // loop_pre_header
      _
    $region3: #{tpu_custom_call.1} parent=1 // loop_header
      %s25 = sphi 0, %s29
      %p26 = scmp.ge.s32.totalorder %s25, 4
      %s35 = sphi 0, %s37
      %s38 = sphi 0, %s35
      %s39 = sphi 0, %s38
      %s55 = sphi 0, %s39
      %s61 = sphi 0, %s63
      %s64 = sphi 0, %s61
      %s65 = sphi 0, %s64
      %s81 = sphi 0, %s65
      %s85 = sphi 0, %s85
      %s87 = sphi 0, %s85
      %s88 = sphi 0, %s87
      %s102 = sphi 0, %s88
      %s106 = sphi 0, %s106
      %s108 = sphi 0, %s106
      %s109 = sphi 0, %s108
      %s123 = sphi 0, %s109
      %s127 = sphi 0, %s127
      %s129 = sphi 0, %s127
      %s130 = sphi 0, %s129
      %s144 = sphi 0, %s130
      %s148 = sphi 0, %s148
      %s150 = sphi 0, %s148
      %s151 = sphi 0, %s150
      %s165 = sphi 0, %s151
      %s169 = sphi 0, %s169
      %s171 = sphi 0, %s169
      %s172 = sphi 0, %s171
      %s186 = sphi 0, %s172
      %s190 = sphi 0, %s190
      %s192 = sphi 0, %s190
      %s193 = sphi 0, %s192
      %s207 = sphi 0, %s193
      %s213 = sphi 0, %s215
      %s216 = sphi 0, %s213
      %s217 = sphi 0, %s216
      %s233 = sphi 0, %s217
    $region4: #{tpu_custom_call.1} parent=1 // loop_header_branch
      %28 = sbr.rel (%p26) target = $region8
    $region5: #{tpu_custom_call.1} parent=1 // loop_body
      %s30 = ssub.s32 %s25, 1
      %s31 = ssub.s32 %s25, 2
      %s32 = sadd.s32 %s25, 1
      %s33 = ssub.s32 %s25, %s32
      %p34 = scmp.eq.s32.totalorder %s33, 0
      %s36 = sadd.s32 %s35, 1
      %s37 = scalar_select %p34, %s35, %s36
      %p40 = pneg %p34
      %p41 = scmp.eq.s32.totalorder %s25, 1
      %p42 = por %p40, %p41
      %p43 = scmp.ne.s32.totalorder %s35, %s38
      %p44 = scmp.eq.s32.totalorder %s25, 0
      %p45 = por %p43, %p44
      %p46 = scmp.ne.s32.totalorder %s35, %s38
      %p47 = scmp.eq.s32.totalorder %s30, 1
      %p48 = por %p46, %p47
      %p49 = scmp.ne.s32.totalorder %s38, %s39
      %p50 = scmp.eq.s32.totalorder %s30, 0
      %p51 = por %p49, %p50
      %p52 = scmp.ne.s32.totalorder %s38, %s39
      %p53 = scmp.eq.s32.totalorder %s31, 1
      %p54 = por %p52, %p53
      %p56 = scmp.ne.s32.totalorder %s39, %s55
      %p57 = scmp.eq.s32.totalorder %s31, 0
      %p58 = por %p56, %p57
      %s59 = ssub.s32 %s25, %s32
      %p60 = scmp.eq.s32.totalorder %s59, 0
      %s62 = sadd.s32 %s61, 1
      %s63 = scalar_select %p60, %s61, %s62
      %p66 = pneg %p60
      %p67 = scmp.eq.s32.totalorder %s25, 1
      %p68 = por %p66, %p67
      %p69 = scmp.ne.s32.totalorder %s61, %s64
      %p70 = scmp.eq.s32.totalorder %s25, 0
      %p71 = por %p69, %p70
      %p72 = scmp.ne.s32.totalorder %s61, %s64
      %p73 = scmp.eq.s32.totalorder %s30, 1
      %p74 = por %p72, %p73
      %p75 = scmp.ne.s32.totalorder %s64, %s65
      %p76 = scmp.eq.s32.totalorder %s30, 0
      %p77 = por %p75, %p76
      %p78 = scmp.ne.s32.totalorder %s64, %s65
      %p79 = scmp.eq.s32.totalorder %s31, 1
      %p80 = por %p78, %p79
      %p82 = scmp.ne.s32.totalorder %s65, %s81
      %p83 = scmp.eq.s32.totalorder %s31, 0
      %p84 = por %p82, %p83
      %s86 = sadd.s32 %s85, 1
      %p89 = scmp.eq.s32.totalorder %s25, 1
      %p90 = scmp.ne.s32.totalorder %s85, %s87
      %p91 = scmp.eq.s32.totalorder %s25, 0
      %p92 = por %p90, %p91
      %p93 = scmp.ne.s32.totalorder %s85, %s87
      %p94 = scmp.eq.s32.totalorder %s30, 1
      %p95 = por %p93, %p94
      %p96 = scmp.ne.s32.totalorder %s87, %s88
      %p97 = scmp.eq.s32.totalorder %s30, 0
      %p98 = por %p96, %p97
      %p99 = scmp.ne.s32.totalorder %s87, %s88
      %p100 = scmp.eq.s32.totalorder %s31, 1
      %p101 = por %p99, %p100
      %p103 = scmp.ne.s32.totalorder %s88, %s102
      %p104 = scmp.eq.s32.totalorder %s31, 0
      %p105 = por %p103, %p104
      %s107 = sadd.s32 %s106, 1
      %p110 = scmp.eq.s32.totalorder %s25, 1
      %p111 = scmp.ne.s32.totalorder %s106, %s108
      %p112 = scmp.eq.s32.totalorder %s25, 0
      %p113 = por %p111, %p112
      %p114 = scmp.ne.s32.totalorder %s106, %s108
      %p115 = scmp.eq.s32.totalorder %s30, 1
      %p116 = por %p114, %p115
      %p117 = scmp.ne.s32.totalorder %s108, %s109
      %p118 = scmp.eq.s32.totalorder %s30, 0
      %p119 = por %p117, %p118
      %p120 = scmp.ne.s32.totalorder %s108, %s109
      %p121 = scmp.eq.s32.totalorder %s31, 1
      %p122 = por %p120, %p121
      %p124 = scmp.ne.s32.totalorder %s109, %s123
      %p125 = scmp.eq.s32.totalorder %s31, 0
      %p126 = por %p124, %p125
      %s128 = sadd.s32 %s127, 1
      %p131 = scmp.eq.s32.totalorder %s25, 1
      %p132 = scmp.ne.s32.totalorder %s127, %s129
      %p133 = scmp.eq.s32.totalorder %s25, 0
      %p134 = por %p132, %p133
      %p135 = scmp.ne.s32.totalorder %s127, %s129
      %p136 = scmp.eq.s32.totalorder %s30, 1
      %p137 = por %p135, %p136
      %p138 = scmp.ne.s32.totalorder %s129, %s130
      %p139 = scmp.eq.s32.totalorder %s30, 0
      %p140 = por %p138, %p139
      %p141 = scmp.ne.s32.totalorder %s129, %s130
      %p142 = scmp.eq.s32.totalorder %s31, 1
      %p143 = por %p141, %p142
      %p145 = scmp.ne.s32.totalorder %s130, %s144
      %p146 = scmp.eq.s32.totalorder %s31, 0
      %p147 = por %p145, %p146
      %s149 = sadd.s32 %s148, 1
      %p152 = scmp.eq.s32.totalorder %s25, 1
      %p153 = scmp.ne.s32.totalorder %s148, %s150
      %p154 = scmp.eq.s32.totalorder %s25, 0
      %p155 = por %p153, %p154
      %p156 = scmp.ne.s32.totalorder %s148, %s150
      %p157 = scmp.eq.s32.totalorder %s30, 1
      %p158 = por %p156, %p157
      %p159 = scmp.ne.s32.totalorder %s150, %s151
      %p160 = scmp.eq.s32.totalorder %s30, 0
      %p161 = por %p159, %p160
      %p162 = scmp.ne.s32.totalorder %s150, %s151
      %p163 = scmp.eq.s32.totalorder %s31, 1
      %p164 = por %p162, %p163
      %p166 = scmp.ne.s32.totalorder %s151, %s165
      %p167 = scmp.eq.s32.totalorder %s31, 0
      %p168 = por %p166, %p167
      %s170 = sadd.s32 %s169, 1
      %p173 = scmp.eq.s32.totalorder %s25, 1
      %p174 = scmp.ne.s32.totalorder %s169, %s171
      %p175 = scmp.eq.s32.totalorder %s25, 0
      %p176 = por %p174, %p175
      %p177 = scmp.ne.s32.totalorder %s169, %s171
      %p178 = scmp.eq.s32.totalorder %s30, 1
      %p179 = por %p177, %p178
      %p180 = scmp.ne.s32.totalorder %s171, %s172
      %p181 = scmp.eq.s32.totalorder %s30, 0
      %p182 = por %p180, %p181
      %p183 = scmp.ne.s32.totalorder %s171, %s172
      %p184 = scmp.eq.s32.totalorder %s31, 1
      %p185 = por %p183, %p184
      %p187 = scmp.ne.s32.totalorder %s172, %s186
      %p188 = scmp.eq.s32.totalorder %s31, 0
      %p189 = por %p187, %p188
      %s191 = sadd.s32 %s190, 1
      %p194 = scmp.eq.s32.totalorder %s25, 1
      %p195 = scmp.ne.s32.totalorder %s190, %s192
      %p196 = scmp.eq.s32.totalorder %s25, 0
      %p197 = por %p195, %p196
      %p198 = scmp.ne.s32.totalorder %s190, %s192
      %p199 = scmp.eq.s32.totalorder %s30, 1
      %p200 = por %p198, %p199
      %p201 = scmp.ne.s32.totalorder %s192, %s193
      %p202 = scmp.eq.s32.totalorder %s30, 0
      %p203 = por %p201, %p202
      %p204 = scmp.ne.s32.totalorder %s192, %s193
      %p205 = scmp.eq.s32.totalorder %s31, 1
      %p206 = por %p204, %p205
      %p208 = scmp.ne.s32.totalorder %s193, %s207
      %p209 = scmp.eq.s32.totalorder %s31, 0
      %p210 = por %p208, %p209
      %s211 = ssub.s32 %s25, %s32
      %p212 = scmp.eq.s32.totalorder %s211, 0
      %s214 = sadd.s32 %s213, 1
      %s215 = scalar_select %p212, %s213, %s214
      %p218 = pneg %p212
      %p219 = scmp.eq.s32.totalorder %s25, 1
      %p220 = por %p218, %p219
      %p221 = scmp.ne.s32.totalorder %s213, %s216
      %p222 = scmp.eq.s32.totalorder %s25, 0
      %p223 = por %p221, %p222
      %p224 = scmp.ne.s32.totalorder %s213, %s216
      %p225 = scmp.eq.s32.totalorder %s30, 1
      %p226 = por %p224, %p225
      %p227 = scmp.ne.s32.totalorder %s216, %s217
      %p228 = scmp.eq.s32.totalorder %s30, 0
      %p229 = por %p227, %p228
      %p230 = scmp.ne.s32.totalorder %s216, %s217
      %p231 = scmp.eq.s32.totalorder %s31, 1
      %p232 = por %p230, %p231
      %p234 = scmp.ne.s32.totalorder %s217, %s233
      %p235 = scmp.eq.s32.totalorder %s31, 0
      %p236 = por %p234, %p235
      %p237 = scmp.le.s32.totalorder 1, %s25
      %p238 = scmp.lt.s32.totalorder %s25, 3
      %p239 = pnand %p237, %p238
      %p240 = pneg %p239
      // Predicated region
      $region9: #{tpu_custom_call.1} parent=5 // pred_check
        _
      $region10: #{tpu_custom_call.1} parent=5 // pred_check_branch
        %242 = sbr.rel (%p239) target = $region12
      $region11: #{tpu_custom_call.1} parent=5 // pred_region
        %s243 = ssub.s32 %s25, 1
        // Predicated region
        $region13: #{tpu_custom_call.1} parent=11 // pred_check
          %p244 = pneg %p98
        $region14: #{tpu_custom_call.1} parent=11 // pred_check_branch
          %246 = sbr.rel (%p244) target = $region16
        $region15: #{tpu_custom_call.1} parent=11 // pred_region
          _
        $region16: #{tpu_custom_call.1} parent=11 // pred_fallthru
          _
        // Predicated region
        $region17: #{tpu_custom_call.1} parent=11 // pred_check
          %p247 = pneg %p119
        $region18: #{tpu_custom_call.1} parent=11 // pred_check_branch
          %249 = sbr.rel (%p247) target = $region20
        $region19: #{tpu_custom_call.1} parent=11 // pred_region
          %s251 = ssub.s32 3072, 3072
          %252 = vsyncadd [#allocation6], %s251
          %s253 = sshll.u32 [#allocation7], 4
          %s254 = int_to_ptr.vmem [resolvable:$true] %s253
          %259 = dma.hbm_to_vmem [thread:$0]  %s3, 3072, %s254, [#allocation6], 192, 192, 12
        $region20: #{tpu_custom_call.1} parent=11 // pred_fallthru
          _
        // Predicated region
        $region21: #{tpu_custom_call.1} parent=11 // pred_check
          %p260 = pneg %p140
        $region22: #{tpu_custom_call.1} parent=11 // pred_check_branch
          %262 = sbr.rel (%p260) target = $region24
        $region23: #{tpu_custom_call.1} parent=11 // pred_region
          %s264 = ssub.s32 1024, 1024
          %265 = vsyncadd [#allocation9], %s264
          %s266 = sshll.u32 [#allocation8], 4
          %s267 = int_to_ptr.vmem [resolvable:$true] %s266
          %272 = dma.hbm_to_vmem [thread:$0]  %s4, 1024, %s267, [#allocation9], 64, 64, 4
        $region24: #{tpu_custom_call.1} parent=11 // pred_fallthru
          _
        // Predicated region
        $region25: #{tpu_custom_call.1} parent=11 // pred_check
          %p273 = pneg %p161
        $region26: #{tpu_custom_call.1} parent=11 // pred_check_branch
          %275 = sbr.rel (%p273) target = $region28
        $region27: #{tpu_custom_call.1} parent=11 // pred_region
          _
        $region28: #{tpu_custom_call.1} parent=11 // pred_fallthru
          _
        // Predicated region
        $region29: #{tpu_custom_call.1} parent=11 // pred_check
          %p276 = pneg %p182
        $region30: #{tpu_custom_call.1} parent=11 // pred_check_branch
          %278 = sbr.rel (%p276) target = $region32
        $region31: #{tpu_custom_call.1} parent=11 // pred_region
          %s280 = ssub.s32 2048, 2048
          %281 = vsyncadd [#allocation9], %s280
          %s282 = sshll.u32 [#allocation10], 4
          %s283 = int_to_ptr.vmem [resolvable:$true] %s282
          %288 = dma.hbm_to_vmem [thread:$0]  %s6, 2048, %s283, [#allocation9], 128, 128, 8
        $region32: #{tpu_custom_call.1} parent=11 // pred_fallthru
          _
        // Predicated region
        $region33: #{tpu_custom_call.1} parent=11 // pred_check
          %p289 = pneg %p203
        $region34: #{tpu_custom_call.1} parent=11 // pred_check_branch
          %291 = sbr.rel (%p289) target = $region36
        $region35: #{tpu_custom_call.1} parent=11 // pred_region
          %s293 = ssub.s32 2048, 2048
          %294 = vsyncadd [#allocation12], %s293
          %s295 = sshll.u32 [#allocation11], 4
          %s296 = int_to_ptr.vmem [resolvable:$true] %s295
          %301 = dma.hbm_to_vmem [thread:$0]  %s7, 2048, %s296, [#allocation12], 64, 64, 4
        $region36: #{tpu_custom_call.1} parent=11 // pred_fallthru
          _
      $region12: #{tpu_custom_call.1} parent=5 // pred_fallthru
        _
      %p302 = scmp.lt.s32.totalorder %s25, 2
      // Predicated region
      $region37: #{tpu_custom_call.1} parent=5 // pred_check
        %p303 = pneg %p302
      $region38: #{tpu_custom_call.1} parent=5 // pred_check_branch
        %305 = sbr.rel (%p303) target = $region40
      $region39: #{tpu_custom_call.1} parent=5 // pred_region
        // Predicated region
        $region41: #{tpu_custom_call.1} parent=39 // pred_check
          %p306 = pneg %p45
        $region42: #{tpu_custom_call.1} parent=39 // pred_check_branch
          %308 = sbr.rel (%p306) target = $region44
        $region43: #{tpu_custom_call.1} parent=39 // pred_region
          %s309 = sand.u32 %s35, 1
          %s310 = scalar_lea.sflag [#allocation3], %s309
          %s311 = sand.u32 %s35, 1
          %s312 = smul.addr %s311, 8
          %s313 = scalar_lea.vmem [#allocation2], %s312
          %s315 = ssub.s32 128, 128
          %316 = vsyncadd %s310, %s315
          %s317 = smul.addr %s25, 128
          %s318 = scalar_lea.hbm %s0, %s317
          %s320 = sshll.u32 %s313, 4
          %s321 = int_to_ptr.vmem [resolvable:$true] %s320
          %323 = dma.hbm_to_vmem [thread:$0]  %s318, 128, %s321, %s310
        $region44: #{tpu_custom_call.1} parent=39 // pred_fallthru
          _
        // Predicated region
        $region45: #{tpu_custom_call.1} parent=39 // pred_check
          %p324 = pneg %p71
        $region46: #{tpu_custom_call.1} parent=39 // pred_check_branch
          %326 = sbr.rel (%p324) target = $region48
        $region47: #{tpu_custom_call.1} parent=39 // pred_region
          %s327 = sand.u32 %s25, 1
          %s328 = scalar_lea.sflag [#allocation6], %s327
          %s329 = sand.u32 %s61, 1
          %s330 = scalar_lea.vmem [#allocation5], %s329
          %s332 = ssub.s32 16, 16
          %333 = vsyncadd %s328, %s332
          %s334 = smul.addr %s25, 16
          %s335 = scalar_lea.hbm %s1, %s334
          %s337 = sshll.u32 %s330, 4
          %s338 = int_to_ptr.vmem [resolvable:$true] %s337
          %340 = dma.hbm_to_vmem [thread:$0]  %s335, 16, %s338, %s328
        $region48: #{tpu_custom_call.1} parent=39 // pred_fallthru
          _
      $region40: #{tpu_custom_call.1} parent=5 // pred_fallthru
        _
      %p341 = scmp.le.s32.totalorder 1, %s25
      %p342 = scmp.lt.s32.totalorder %s25, 3
      %p343 = pnand %p341, %p342
      %p344 = pneg %p343
      // Predicated region
      $region49: #{tpu_custom_call.1} parent=5 // pred_check
        _
      $region50: #{tpu_custom_call.1} parent=5 // pred_check_branch
        %346 = sbr.rel (%p343) target = $region52
      $region51: #{tpu_custom_call.1} parent=5 // pred_region
        %s347 = ssub.s32 %s25, 1
        %s348 = sand.u32 %s38, 1
        %s349 = scalar_lea.sflag [#allocation3], %s348
        %s350 = sand.u32 %s38, 1
        %s351 = smul.addr %s350, 8
        %s352 = scalar_lea.vmem [#allocation2], %s351
        // Predicated region
        $region53: #{tpu_custom_call.1} parent=51 // pred_check
          %p353 = pneg %p51
        $region54: #{tpu_custom_call.1} parent=51 // pred_check_branch
          %355 = sbr.rel (%p353) target = $region56
        $region55: #{tpu_custom_call.1} parent=51 // pred_region
          %356 = dma.done %s349, 128
        $region56: #{tpu_custom_call.1} parent=51 // pred_fallthru
          _
        %s357 = sand.u32 %s30, 1
        %s358 = scalar_lea.sflag [#allocation6], %s357
        %s359 = sand.u32 %s64, 1
        %s360 = scalar_lea.vmem [#allocation5], %s359
        // Predicated region
        $region57: #{tpu_custom_call.1} parent=51 // pred_check
          %p361 = pneg %p77
        $region58: #{tpu_custom_call.1} parent=51 // pred_check_branch
          %363 = sbr.rel (%p361) target = $region60
        $region59: #{tpu_custom_call.1} parent=51 // pred_region
          %364 = dma.done %s358, 16
        $region60: #{tpu_custom_call.1} parent=51 // pred_fallthru
          _
        // Predicated region
        $region61: #{tpu_custom_call.1} parent=51 // pred_check
          %p365 = pneg %p119
        $region62: #{tpu_custom_call.1} parent=51 // pred_check_branch
          %367 = sbr.rel (%p365) target = $region64
        $region63: #{tpu_custom_call.1} parent=51 // pred_region
          %368 = dma.done [#allocation6], 3072
        $region64: #{tpu_custom_call.1} parent=51 // pred_fallthru
          _
        // Predicated region
        $region65: #{tpu_custom_call.1} parent=51 // pred_check
          %p369 = pneg %p140
        $region66: #{tpu_custom_call.1} parent=51 // pred_check_branch
          %371 = sbr.rel (%p369) target = $region68
        $region67: #{tpu_custom_call.1} parent=51 // pred_region
          %372 = dma.done [#allocation9], 1024
        $region68: #{tpu_custom_call.1} parent=51 // pred_fallthru
          _
        // Predicated region
        $region69: #{tpu_custom_call.1} parent=51 // pred_check
          %p373 = pneg %p182
        $region70: #{tpu_custom_call.1} parent=51 // pred_check_branch
          %375 = sbr.rel (%p373) target = $region72
        $region71: #{tpu_custom_call.1} parent=51 // pred_region
          %376 = dma.done [#allocation9], 2048
        $region72: #{tpu_custom_call.1} parent=51 // pred_fallthru
          _
        // Predicated region
        $region73: #{tpu_custom_call.1} parent=51 // pred_check
          %p377 = pneg %p203
        $region74: #{tpu_custom_call.1} parent=51 // pred_check_branch
          %379 = sbr.rel (%p377) target = $region76
        $region75: #{tpu_custom_call.1} parent=51 // pred_region
          %380 = dma.done [#allocation12], 2048
        $region76: #{tpu_custom_call.1} parent=51 // pred_fallthru
          _
        %s381 = sand.u32 %s38, 1
        %s382 = scalar_lea.sflag [#allocation3], %s381
        %s383 = sand.u32 %s38, 1
        %s384 = smul.addr %s383, 8
        %s385 = scalar_lea.vmem [#allocation2], %s384
        %p386 = pneg %p51
        %p387 = pneg %p48
        %s388 = sand.u32 %s30, 1
        %s389 = scalar_lea.sflag [#allocation6], %s388
        %s390 = sand.u32 %s64, 1
        %s391 = scalar_lea.vmem [#allocation5], %s390
        %p392 = pneg %p77
        %p393 = pneg %p74
        %p394 = pneg %p98
        %p395 = pneg %p95
        %p396 = pneg %p119
        %p397 = pneg %p116
        %p398 = pneg %p140
        %p399 = pneg %p137
        %p400 = pneg %p161
        %p401 = pneg %p158
        %p402 = pneg %p182
        %p403 = pneg %p179
        %p404 = pneg %p203
        %p405 = pneg %p200
        %p406 = pneg %p229
        %p407 = pneg %p226
        %s408 = sand.u32 %s216, 1
        %s409 = scalar_lea.sflag [#allocation4], %s408
        %s410 = sand.u32 %s216, 1
        %s411 = smul.addr %s410, 8
        %s412 = scalar_lea.vmem [#allocation13], %s411
        %v414 = vld [vmem:[%s352] sm:$0xff]
        %v415 = vld [vmem:[%s360] sm:$0x1]
        %v416 = vmul.f32 %v414, %v414
        %417 = vadd.xlane.f32.xlu0 %v416
        %v418 = vpop.xlane.xlu0 %417
        %v419 = vrcp.pop 128.0
        %v420 = vmul.f32 %v418, %v419
        %v421 = vadd.f32 %v420, 1e-06
        %v422 = vrsqrt.pop %v421
        %v423 = vmul.f32 %v414, %v422
        %v424 = vld [vmem:[%s2] sm:$0x1]
        %v426 = vlaneseq
        %v427 = vshrl.u32 %v426, 7
        %v428 = vsub.s32 0, %v427
        %v429 = vrot.slane %v424, %v428
        %v431 = vmul.f32 %v423, %v429
        %v432 = vpack.c.bf16 %v431, %v431
        %v433 = vld [vmem:[#allocation7] sm:$0xff]
        %v434 = vld [vmem:[#allocation7 + $0x8] sm:$0xf]
        %v435 = vld [vmem:[#allocation7 + $0xc] sm:$0xff]
        %v436 = vld [vmem:[#allocation7 + $0x14] sm:$0xf]
        %v437 = vld [vmem:[#allocation7 + $0x18] sm:$0xff]
        %v438 = vld [vmem:[#allocation7 + $0x20] sm:$0xf]
        %v439 = vld [vmem:[#allocation7 + $0x24] sm:$0xff]
        %v440 = vld [vmem:[#allocation7 + $0x2c] sm:$0xf]
        %v441 = vld [vmem:[#allocation7 + $0x30] sm:$0xff]
        %v442 = vld [vmem:[#allocation7 + $0x38] sm:$0xf]
        %v443 = vld [vmem:[#allocation7 + $0x3c] sm:$0xff]
        %v444 = vld [vmem:[#allocation7 + $0x44] sm:$0xf]
        %v445 = vld [vmem:[#allocation7 + $0x48] sm:$0xff]
        %v446 = vld [vmem:[#allocation7 + $0x50] sm:$0xf]
        %v447 = vld [vmem:[#allocation7 + $0x54] sm:$0xff]
        %v448 = vld [vmem:[#allocation7 + $0x5c] sm:$0xf]
        %v449 = vld [vmem:[#allocation7 + $0x60] sm:$0xff]
        %v450 = vld [vmem:[#allocation7 + $0x68] sm:$0xf]
        %v451 = vld [vmem:[#allocation7 + $0x6c] sm:$0xff]
        %v452 = vld [vmem:[#allocation7 + $0x74] sm:$0xf]
        %v453 = vld [vmem:[#allocation7 + $0x78] sm:$0xff]
        %v454 = vld [vmem:[#allocation7 + $0x80] sm:$0xf]
        %v455 = vld [vmem:[#allocation7 + $0x84] sm:$0xff]
        %v456 = vld [vmem:[#allocation7 + $0x8c] sm:$0xf]
        %v457 = vld [vmem:[#allocation7 + $0x90] sm:$0xff]
        %v458 = vld [vmem:[#allocation7 + $0x98] sm:$0xf]
        %v459 = vld [vmem:[#allocation7 + $0x9c] sm:$0xff]
        %v460 = vld [vmem:[#allocation7 + $0xa4] sm:$0xf]
        %v461 = vld [vmem:[#allocation7 + $0xa8] sm:$0xff]
        %v462 = vld [vmem:[#allocation7 + $0xb0] sm:$0xf]
        %v463 = vld [vmem:[#allocation7 + $0xb4] sm:$0xff]
        %v464 = vld [vmem:[#allocation7 + $0xbc] sm:$0xf]
        %v497 = vunpack.c.l.b16 %v433
        %v498 = vunpack.c.h.b16 %v433
        %v499 = vunpack.c.l.b16 %v434
        %v500 = vunpack.c.l.b16 %v435
        %v501 = vunpack.c.h.b16 %v435
        %v502 = vunpack.c.l.b16 %v436
        %v503 = vunpack.c.l.b16 %v437
        %v504 = vunpack.c.h.b16 %v437
        %v505 = vunpack.c.l.b16 %v438
        %v506 = vunpack.c.l.b16 %v439
        %v507 = vunpack.c.h.b16 %v439
        %v508 = vunpack.c.l.b16 %v440
        %v509 = vunpack.c.l.b16 %v441
        %v510 = vunpack.c.h.b16 %v441
        %v511 = vunpack.c.l.b16 %v442
        %v512 = vunpack.c.l.b16 %v443
        %v513 = vunpack.c.h.b16 %v443
        %v514 = vunpack.c.l.b16 %v444
        %v515 = vunpack.c.l.b16 %v445
        %v516 = vunpack.c.h.b16 %v445
        %v517 = vunpack.c.l.b16 %v446
        %v518 = vunpack.c.l.b16 %v447
        %v519 = vunpack.c.h.b16 %v447
        %v520 = vunpack.c.l.b16 %v448
        %v521 = vunpack.c.l.b16 %v449
        %v522 = vunpack.c.h.b16 %v449
        %v523 = vunpack.c.l.b16 %v450
        %v524 = vunpack.c.l.b16 %v451
        %v525 = vunpack.c.h.b16 %v451
        %v526 = vunpack.c.l.b16 %v452
        %v527 = vunpack.c.l.b16 %v453
        %v528 = vunpack.c.h.b16 %v453
        %v529 = vunpack.c.l.b16 %v454
        %v530 = vunpack.c.l.b16 %v455
        %v531 = vunpack.c.h.b16 %v455
        %v532 = vunpack.c.l.b16 %v456
        %v533 = vunpack.c.l.b16 %v457
        %v534 = vunpack.c.h.b16 %v457
        %v535 = vunpack.c.l.b16 %v458
        %v536 = vunpack.c.l.b16 %v459
        %v537 = vunpack.c.h.b16 %v459
        %v538 = vunpack.c.l.b16 %v460
        %v539 = vunpack.c.l.b16 %v461
        %v540 = vunpack.c.h.b16 %v461
        %v541 = vunpack.c.l.b16 %v462
        %v542 = vunpack.c.l.b16 %v463
        %v543 = vunpack.c.h.b16 %v463
        %v544 = vunpack.c.l.b16 %v464
        %v545 = vpack.c.b16 %v500, %v497
        %v546 = vpack.c.b16 %v501, %v498
        %v547 = vpack.c.b16 %v502, %v499
        %v548 = vpack.c.b16 %v506, %v503
        %v549 = vpack.c.b16 %v507, %v504
        %v550 = vpack.c.b16 %v508, %v505
        %v551 = vpack.c.b16 %v512, %v509
        %v552 = vpack.c.b16 %v513, %v510
        %v553 = vpack.c.b16 %v514, %v511
        %v554 = vpack.c.b16 %v518, %v515
        %v555 = vpack.c.b16 %v519, %v516
        %v556 = vpack.c.b16 %v520, %v517
        %v557 = vpack.c.b16 %v524, %v521
        %v558 = vpack.c.b16 %v525, %v522
        %v559 = vpack.c.b16 %v526, %v523
        %v560 = vpack.c.b16 %v530, %v527
        %v561 = vpack.c.b16 %v531, %v528
        %v562 = vpack.c.b16 %v532, %v529
        %v563 = vpack.c.b16 %v536, %v533
        %v564 = vpack.c.b16 %v537, %v534
        %v565 = vpack.c.b16 %v538, %v535
        %v566 = vpack.c.b16 %v542, %v539
        %v567 = vpack.c.b16 %v543, %v540
        %v568 = vpack.c.b16 %v544, %v541
        %593 = vmatprep.subr.bf16.mxu0 %v567
        %594 = vmatpush1.bf16.msra.mxu0 %v566
        %595 = vmatprep.subr.bf16.mxu0 %v564
        %596 = vmatpush1.bf16.msra.mxu0 %v563
        %597 = vmatprep.subr.bf16.mxu0 %v561
        %598 = vmatpush1.bf16.msra.mxu0 %v560
        %599 = vmatprep.subr.bf16.mxu0 %v558
        %600 = vmatpush1.bf16.msra.mxu0 %v557
        %601 = vmatprep.subr.bf16.mxu0 %v555
        %602 = vmatpush1.bf16.msra.mxu0 %v554
        %603 = vmatprep.subr.bf16.mxu0 %v552
        %604 = vmatpush1.bf16.msra.mxu0 %v551
        %605 = vmatprep.subr.bf16.mxu0 %v549
        %606 = vmatpush1.bf16.msra.mxu0 %v548
        %607 = vmatprep.subr.bf16.mxu0 %v546
        %608 = vmatpush1.bf16.msra.mxu0 %v545
        %609 = vmatprep.subr.bf16.mxu0 0
        %610 = vmatpush2.bf16.msra.mxu0 0
        %611 = vmatprep.subr.bf16.mxu0 0
        %612 = vmatpush2.bf16.msra.mxu0 0
        %613 = vmatprep.subr.bf16.mxu0 0
        %614 = vmatpush2.bf16.msra.mxu0 0
        %615 = vmatprep.subr.bf16.mxu0 0
        %616 = vmatpush2.bf16.msra.mxu0 0
        %617 = vmatprep.subr.bf16.mxu0 0
        %618 = vmatpush2.bf16.msra.mxu0 0
        %619 = vmatprep.subr.bf16.mxu0 0
        %620 = vmatpush2.bf16.msra.mxu0 0
        %621 = vmatprep.subr.bf16.mxu0 0
        %622 = vmatpush2.bf16.msra.mxu0 0
        %623 = vmatprep.subr.bf16.mxu0 0
        %624 = vmatpush2.bf16.msra.mxu0 0
        %625 = vmatprep.mubr.bf16.mxu0 0
        %626 = vmatmul.mubr.bf16.gmra.mxu0 %v432
        %v627 = vpop.f32.mrf.mxu0
        %v628 = vadd.f32 0.0, %v627
        %v629 = vpop.f32.mrf.mxu0
        %v630 = vadd.f32 0.0, %v629
        %v631 = vpop.f32.mrf.mxu0
        %v632 = vpop.f32.mrf.mxu0
        %633 = vdwg.mxu0
        %634 = vmatprep.subr.bf16.mxu0 0
        %635 = vmatpush1.bf16.msra.mxu0 %v568
        %636 = vmatprep.subr.bf16.mxu0 0
        %637 = vmatpush1.bf16.msra.mxu0 %v565
        %638 = vmatprep.subr.bf16.mxu0 0
        %639 = vmatpush1.bf16.msra.mxu0 %v562
        %640 = vmatprep.subr.bf16.mxu0 0
        %641 = vmatpush1.bf16.msra.mxu0 %v559
        %642 = vmatprep.subr.bf16.mxu0 0
        %643 = vmatpush1.bf16.msra.mxu0 %v556
        %644 = vmatprep.subr.bf16.mxu0 0
        %645 = vmatpush1.bf16.msra.mxu0 %v553
        %646 = vmatprep.subr.bf16.mxu0 0
        %647 = vmatpush1.bf16.msra.mxu0 %v550
        %648 = vmatprep.subr.bf16.mxu0 0
        %649 = vmatpush1.bf16.msra.mxu0 %v547
        %650 = vmatprep.subr.bf16.mxu0 0
        %651 = vmatpush2.bf16.msra.mxu0 0
        %652 = vmatprep.subr.bf16.mxu0 0
        %653 = vmatpush2.bf16.msra.mxu0 0
        %654 = vmatprep.subr.bf16.mxu0 0
        %655 = vmatpush2.bf16.msra.mxu0 0
        %656 = vmatprep.subr.bf16.mxu0 0
        %657 = vmatpush2.bf16.msra.mxu0 0
        %658 = vmatprep.subr.bf16.mxu0 0
        %659 = vmatpush2.bf16.msra.mxu0 0
        %660 = vmatprep.subr.bf16.mxu0 0
        %661 = vmatpush2.bf16.msra.mxu0 0
        %662 = vmatprep.subr.bf16.mxu0 0
        %663 = vmatpush2.bf16.msra.mxu0 0
        %664 = vmatprep.subr.bf16.mxu0 0
        %665 = vmatpush2.bf16.msra.mxu0 0
        %666 = vmatprep.mubr.bf16.mxu0 0
        %667 = vmatmul.mubr.bf16.gmra.mxu0 %v432
        %v668 = vpop.f32.mrf.mxu0
        %v669 = vadd.f32 0.0, %v668
        %v670 = vpop.f32.mrf.mxu0
        %v671 = vpop.f32.mrf.mxu0
        %v672 = vpop.f32.mrf.mxu0
        %673 = vdwg.mxu0
        %v675 = vlaneseq
        %v676 = vshrl.u32 %v675, 7
        %v677 = vsub.s32 0, %v676
        %v678 = vrot.slane %v415, %v677
        %vm680 = vcmask 261120
        %v682 = vsel %vm680, %v628, 0
        %v685 = vsel %vm680, %v630, 0
        %687 = vmatprep.subr.mxu0 0.0
        %688 = vmatpush1.xpose.msra.mxu0 0.0
        %689 = vmatprep.subr.mxu0 0.0
        %690 = vmatpush1.xpose.msra.mxu0 0.0
        %691 = vmatprep.subr.mxu0 0.0
        %692 = vmatpush1.xpose.msra.mxu0 0.0
        %693 = vmatprep.subr.mxu0 0.0
        %694 = vmatpush1.xpose.msra.mxu0 0.0
        %695 = vmatprep.subr.mxu0 0.0
        %696 = vmatpush1.xpose.msra.mxu0 0.0
        %697 = vmatprep.subr.mxu0 0.0
        %698 = vmatpush1.xpose.msra.mxu0 0.0
        %699 = vmatprep.subr.mxu0 0.0
        %700 = vmatpush1.xpose.msra.mxu0 0.0
        %701 = vmatprep.subr.mxu0 0.0
        %702 = vmatpush1.xpose.msra.mxu0 0.0
        %703 = vmatprep.subr.mxu0 0.0
        %704 = vmatpush1.xpose.msra.mxu0 0.0
        %705 = vmatprep.subr.mxu0 0.0
        %706 = vmatpush1.xpose.msra.mxu0 0.0
        %707 = vmatprep.subr.mxu0 0.0
        %708 = vmatpush1.xpose.msra.mxu0 0.0
        %709 = vmatprep.subr.mxu0 0.0
        %710 = vmatpush1.xpose.msra.mxu0 0.0
        %711 = vmatprep.subr.mxu0 0.0
        %712 = vmatpush1.xpose.msra.mxu0 0.0
        %713 = vmatprep.subr.mxu0 0.0
        %714 = vmatpush1.xpose.msra.mxu0 0.0
        %715 = vmatprep.subr.mxu0 0.0
        %716 = vmatpush1.xpose.msra.mxu0 0.0
        %717 = vmatprep.subr.mxu0 0.0
        %718 = vmatpush1.xpose.msra.mxu0 %v685
        %719 = vmatprep.subr.mxu0 0.0
        %720 = vmatpush2.xpose.msra.mxu0 0.0
        %721 = vmatprep.subr.mxu0 0.0
        %722 = vmatpush2.xpose.msra.mxu0 0.0
        %723 = vmatprep.subr.mxu0 0.0
        %724 = vmatpush2.xpose.msra.mxu0 0.0
        %725 = vmatprep.subr.mxu0 0.0
        %726 = vmatpush2.xpose.msra.mxu0 0.0
        %727 = vmatprep.subr.mxu0 0.0
        %728 = vmatpush2.xpose.msra.mxu0 0.0
        %729 = vmatprep.subr.mxu0 0.0
        %730 = vmatpush2.xpose.msra.mxu0 0.0
        %731 = vmatprep.subr.mxu0 0.0
        %732 = vmatpush2.xpose.msra.mxu0 0.0
        %733 = vmatprep.subr.mxu0 0.0
        %734 = vmatpush2.xpose.msra.mxu0 0.0
        %735 = vmatprep.subr.mxu0 0.0
        %736 = vmatpush2.xpose.msra.mxu0 0.0
        %737 = vmatprep.subr.mxu0 0.0
        %738 = vmatpush2.xpose.msra.mxu0 0.0
        %739 = vmatprep.subr.mxu0 0.0
        %740 = vmatpush2.xpose.msra.mxu0 0.0
        %741 = vmatprep.subr.mxu0 0.0
        %742 = vmatpush2.xpose.msra.mxu0 0.0
        %743 = vmatprep.subr.mxu0 0.0
        %744 = vmatpush2.xpose.msra.mxu0 0.0
        %745 = vmatprep.subr.mxu0 0.0
        %746 = vmatpush2.xpose.msra.mxu0 0.0
        %747 = vmatprep.subr.mxu0 0.0
        %748 = vmatpush2.xpose.msra.mxu0 0.0
        %749 = vmatprep.subr.mxu0 0.0
        %750 = vmatpush2.xpose.msra.mxu0 0.0
        %751 = vmatprep.mubr.f32.mxu0 0.0
        %752 = vmatmul.mubr.f32.gmra.mxu0 %v682
        %v753 = vpop.f32.mrf.mxu0
        %v754 = vadd.f32 %v678, %v753
        %v755 = vpop.f32.mrf.mxu0
        %756 = vdwg.mxu0
        %vm757 = vcmask 64512
        %v758 = vsel %vm757, %v754, -inf
        %759 = vmax.xlane.f32.xlu0 %v758
        %v760 = vpop.xlane.xlu0 %759
        %v761 = vsub.f32 %v754, %v760
        %v762 = vmul.f32 %v761, 1.442695
        %v763 = vpow.pop %v762
        %v764 = vsel %vm757, %v763, 0.0
        %765 = vadd.xlane.f32.xlu0 %v764
        %v766 = vpop.xlane.xlu0 %765
        %v767 = vrcp.pop %v766
        %v768 = vmul.f32 %v763, %v767
        %v770 = vsel %vm757, %v768, 0
        %772 = vmatprep.subr.mxu0 0.0
        %773 = vmatpush1.msra.mxu0 0.0
        %774 = vmatprep.subr.mxu0 0.0
        %775 = vmatpush1.msra.mxu0 0.0
        %776 = vmatprep.subr.mxu0 0.0
        %777 = vmatpush1.msra.mxu0 0.0
        %778 = vmatprep.subr.mxu0 0.0
        %779 = vmatpush1.msra.mxu0 0.0
        %780 = vmatprep.subr.mxu0 0.0
        %781 = vmatpush1.msra.mxu0 0.0
        %782 = vmatprep.subr.mxu0 0.0
        %783 = vmatpush1.msra.mxu0 0.0
        %784 = vmatprep.subr.mxu0 0.0
        %785 = vmatpush1.msra.mxu0 0.0
        %786 = vmatprep.subr.mxu0 0.0
        %787 = vmatpush1.msra.mxu0 0.0
        %788 = vmatprep.subr.mxu0 0.0
        %789 = vmatpush1.msra.mxu0 0.0
        %790 = vmatprep.subr.mxu0 0.0
        %791 = vmatpush1.msra.mxu0 0.0
        %792 = vmatprep.subr.mxu0 0.0
        %793 = vmatpush1.msra.mxu0 0.0
        %794 = vmatprep.subr.mxu0 0.0
        %795 = vmatpush1.msra.mxu0 0.0
        %796 = vmatprep.subr.mxu0 0.0
        %797 = vmatpush1.msra.mxu0 0.0
        %798 = vmatprep.subr.mxu0 0.0
        %799 = vmatpush1.msra.mxu0 0.0
        %800 = vmatprep.subr.mxu0 0.0
        %801 = vmatpush1.msra.mxu0 0.0
        %802 = vmatprep.subr.mxu0 0.0
        %803 = vmatpush1.msra.mxu0 %v669
        %804 = vmatprep.subr.mxu0 0.0
        %805 = vmatpush2.msra.mxu0 0.0
        %806 = vmatprep.subr.mxu0 0.0
        %807 = vmatpush2.msra.mxu0 0.0
        %808 = vmatprep.subr.mxu0 0.0
        %809 = vmatpush2.msra.mxu0 0.0
        %810 = vmatprep.subr.mxu0 0.0
        %811 = vmatpush2.msra.mxu0 0.0
        %812 = vmatprep.subr.mxu0 0.0
        %813 = vmatpush2.msra.mxu0 0.0
        %814 = vmatprep.subr.mxu0 0.0
        %815 = vmatpush2.msra.mxu0 0.0
        %816 = vmatprep.subr.mxu0 0.0
        %817 = vmatpush2.msra.mxu0 0.0
        %818 = vmatprep.subr.mxu0 0.0
        %819 = vmatpush2.msra.mxu0 0.0
        %820 = vmatprep.subr.mxu0 0.0
        %821 = vmatpush2.msra.mxu0 0.0
        %822 = vmatprep.subr.mxu0 0.0
        %823 = vmatpush2.msra.mxu0 0.0
        %824 = vmatprep.subr.mxu0 0.0
        %825 = vmatpush2.msra.mxu0 0.0
        %826 = vmatprep.subr.mxu0 0.0
        %827 = vmatpush2.msra.mxu0 0.0
        %828 = vmatprep.subr.mxu0 0.0
        %829 = vmatpush2.msra.mxu0 0.0
        %830 = vmatprep.subr.mxu0 0.0
        %831 = vmatpush2.msra.mxu0 0.0
        %832 = vmatprep.subr.mxu0 0.0
        %833 = vmatpush2.msra.mxu0 0.0
        %834 = vmatprep.subr.mxu0 0.0
        %835 = vmatpush2.msra.mxu0 0.0
        %836 = vmatprep.mubr.f32.mxu0 0.0
        %837 = vmatmul.mubr.f32.gmra.mxu0 %v770
        %v838 = vpop.f32.mrf.mxu0
        %v839 = vadd.f32 0.0, %v838
        %v840 = vpop.f32.mrf.mxu0
        %841 = vdwg.mxu0
        %842 = vrot.lane.b32.xlu0 %v628, 96
        %v843 = vpop.permute.xlu0 %842
        %844 = vrot.lane.b32.xlu0 %v630, 96
        %v845 = vpop.permute.xlu0 %844
        %v846 = vsel %vm680, %v843, 0
        %v848 = vsel %vm680, %v845, 0
        %850 = vmatprep.subr.mxu0 0.0
        %851 = vmatpush1.xpose.msra.mxu0 0.0
        %852 = vmatprep.subr.mxu0 0.0
        %853 = vmatpush1.xpose.msra.mxu0 0.0
        %854 = vmatprep.subr.mxu0 0.0
        %855 = vmatpush1.xpose.msra.mxu0 0.0
        %856 = vmatprep.subr.mxu0 0.0
        %857 = vmatpush1.xpose.msra.mxu0 0.0
        %858 = vmatprep.subr.mxu0 0.0
        %859 = vmatpush1.xpose.msra.mxu0 0.0
        %860 = vmatprep.subr.mxu0 0.0
        %861 = vmatpush1.xpose.msra.mxu0 0.0
        %862 = vmatprep.subr.mxu0 0.0
        %863 = vmatpush1.xpose.msra.mxu0 0.0
        %864 = vmatprep.subr.mxu0 0.0
        %865 = vmatpush1.xpose.msra.mxu0 0.0
        %866 = vmatprep.subr.mxu0 0.0
        %867 = vmatpush1.xpose.msra.mxu0 0.0
        %868 = vmatprep.subr.mxu0 0.0
        %869 = vmatpush1.xpose.msra.mxu0 0.0
        %870 = vmatprep.subr.mxu0 0.0
        %871 = vmatpush1.xpose.msra.mxu0 0.0
        %872 = vmatprep.subr.mxu0 0.0
        %873 = vmatpush1.xpose.msra.mxu0 0.0
        %874 = vmatprep.subr.mxu0 0.0
        %875 = vmatpush1.xpose.msra.mxu0 0.0
        %876 = vmatprep.subr.mxu0 0.0
        %877 = vmatpush1.xpose.msra.mxu0 0.0
        %878 = vmatprep.subr.mxu0 0.0
        %879 = vmatpush1.xpose.msra.mxu0 0.0
        %880 = vmatprep.subr.mxu0 0.0
        %881 = vmatpush1.xpose.msra.mxu0 %v848
        %882 = vmatprep.subr.mxu0 0.0
        %883 = vmatpush2.xpose.msra.mxu0 0.0
        %884 = vmatprep.subr.mxu0 0.0
        %885 = vmatpush2.xpose.msra.mxu0 0.0
        %886 = vmatprep.subr.mxu0 0.0
        %887 = vmatpush2.xpose.msra.mxu0 0.0
        %888 = vmatprep.subr.mxu0 0.0
        %889 = vmatpush2.xpose.msra.mxu0 0.0
        %890 = vmatprep.subr.mxu0 0.0
        %891 = vmatpush2.xpose.msra.mxu0 0.0
        %892 = vmatprep.subr.mxu0 0.0
        %893 = vmatpush2.xpose.msra.mxu0 0.0
        %894 = vmatprep.subr.mxu0 0.0
        %895 = vmatpush2.xpose.msra.mxu0 0.0
        %896 = vmatprep.subr.mxu0 0.0
        %897 = vmatpush2.xpose.msra.mxu0 0.0
        %898 = vmatprep.subr.mxu0 0.0
        %899 = vmatpush2.xpose.msra.mxu0 0.0
        %900 = vmatprep.subr.mxu0 0.0
        %901 = vmatpush2.xpose.msra.mxu0 0.0
        %902 = vmatprep.subr.mxu0 0.0
        %903 = vmatpush2.xpose.msra.mxu0 0.0
        %904 = vmatprep.subr.mxu0 0.0
        %905 = vmatpush2.xpose.msra.mxu0 0.0
        %906 = vmatprep.subr.mxu0 0.0
        %907 = vmatpush2.xpose.msra.mxu0 0.0
        %908 = vmatprep.subr.mxu0 0.0
        %909 = vmatpush2.xpose.msra.mxu0 0.0
        %910 = vmatprep.subr.mxu0 0.0
        %911 = vmatpush2.xpose.msra.mxu0 0.0
        %912 = vmatprep.subr.mxu0 0.0
        %913 = vmatpush2.xpose.msra.mxu0 0.0
        %914 = vmatprep.mubr.f32.mxu0 0.0
        %915 = vmatmul.mubr.f32.gmra.mxu0 %v846
        %v916 = vpop.f32.mrf.mxu0
        %v917 = vadd.f32 %v678, %v916
        %v918 = vpop.f32.mrf.mxu0
        %919 = vdwg.mxu0
        %v920 = vsel %vm757, %v917, -inf
        %921 = vmax.xlane.f32.xlu0 %v920
        %v922 = vpop.xlane.xlu0 %921
        %v923 = vsub.f32 %v917, %v922
        %v924 = vmul.f32 %v923, 1.442695
        %v925 = vpow.pop %v924
        %v926 = vsel %vm757, %v925, 0.0
        %927 = vadd.xlane.f32.xlu0 %v926
        %v928 = vpop.xlane.xlu0 %927
        %v929 = vrcp.pop %v928
        %v930 = vmul.f32 %v925, %v929
        %932 = vrot.lane.b32.xlu0 %v669, 96
        %v933 = vpop.permute.xlu0 %932
        %v936 = vsel %vm757, %v930, 0
        %938 = vmatprep.subr.mxu0 0.0
        %939 = vmatpush1.msra.mxu0 0.0
        %940 = vmatprep.subr.mxu0 0.0
        %941 = vmatpush1.msra.mxu0 0.0
        %942 = vmatprep.subr.mxu0 0.0
        %943 = vmatpush1.msra.mxu0 0.0
        %944 = vmatprep.subr.mxu0 0.0
        %945 = vmatpush1.msra.mxu0 0.0
        %946 = vmatprep.subr.mxu0 0.0
        %947 = vmatpush1.msra.mxu0 0.0
        %948 = vmatprep.subr.mxu0 0.0
        %949 = vmatpush1.msra.mxu0 0.0
        %950 = vmatprep.subr.mxu0 0.0
        %951 = vmatpush1.msra.mxu0 0.0
        %952 = vmatprep.subr.mxu0 0.0
        %953 = vmatpush1.msra.mxu0 0.0
        %954 = vmatprep.subr.mxu0 0.0
        %955 = vmatpush1.msra.mxu0 0.0
        %956 = vmatprep.subr.mxu0 0.0
        %957 = vmatpush1.msra.mxu0 0.0
        %958 = vmatprep.subr.mxu0 0.0
        %959 = vmatpush1.msra.mxu0 0.0
        %960 = vmatprep.subr.mxu0 0.0
        %961 = vmatpush1.msra.mxu0 0.0
        %962 = vmatprep.subr.mxu0 0.0
        %963 = vmatpush1.msra.mxu0 0.0
        %964 = vmatprep.subr.mxu0 0.0
        %965 = vmatpush1.msra.mxu0 0.0
        %966 = vmatprep.subr.mxu0 0.0
        %967 = vmatpush1.msra.mxu0 0.0
        %968 = vmatprep.subr.mxu0 0.0
        %969 = vmatpush1.msra.mxu0 %v933
        %970 = vmatprep.subr.mxu0 0.0
        %971 = vmatpush2.msra.mxu0 0.0
        %972 = vmatprep.subr.mxu0 0.0
        %973 = vmatpush2.msra.mxu0 0.0
        %974 = vmatprep.subr.mxu0 0.0
        %975 = vmatpush2.msra.mxu0 0.0
        %976 = vmatprep.subr.mxu0 0.0
        %977 = vmatpush2.msra.mxu0 0.0
        %978 = vmatprep.subr.mxu0 0.0
        %979 = vmatpush2.msra.mxu0 0.0
        %980 = vmatprep.subr.mxu0 0.0
        %981 = vmatpush2.msra.mxu0 0.0
        %982 = vmatprep.subr.mxu0 0.0
        %983 = vmatpush2.msra.mxu0 0.0
        %984 = vmatprep.subr.mxu0 0.0
        %985 = vmatpush2.msra.mxu0 0.0
        %986 = vmatprep.subr.mxu0 0.0
        %987 = vmatpush2.msra.mxu0 0.0
        %988 = vmatprep.subr.mxu0 0.0
        %989 = vmatpush2.msra.mxu0 0.0
        %990 = vmatprep.subr.mxu0 0.0
        %991 = vmatpush2.msra.mxu0 0.0
        %992 = vmatprep.subr.mxu0 0.0
        %993 = vmatpush2.msra.mxu0 0.0
        %994 = vmatprep.subr.mxu0 0.0
        %995 = vmatpush2.msra.mxu0 0.0
        %996 = vmatprep.subr.mxu0 0.0
        %997 = vmatpush2.msra.mxu0 0.0
        %998 = vmatprep.subr.mxu0 0.0
        %999 = vmatpush2.msra.mxu0 0.0
        %1000 = vmatprep.subr.mxu0 0.0
        %1001 = vmatpush2.msra.mxu0 0.0
        %1002 = vmatprep.mubr.f32.mxu0 0.0
        %1003 = vmatmul.mubr.f32.gmra.mxu0 %v936
        %v1004 = vpop.f32.mrf.mxu0
        %v1005 = vadd.f32 0.0, %v1004
        %v1006 = vpop.f32.mrf.mxu0
        %1007 = vdwg.mxu0
        %1008 = vrot.lane.b32.xlu0 %v628, 64
        %v1009 = vpop.permute.xlu0 %1008
        %1010 = vrot.lane.b32.xlu0 %v630, 64
        %v1011 = vpop.permute.xlu0 %1010
        %v1012 = vsel %vm680, %v1009, 0
        %v1014 = vsel %vm680, %v1011, 0
        %1016 = vmatprep.subr.mxu0 0.0
        %1017 = vmatpush1.xpose.msra.mxu0 0.0
        %1018 = vmatprep.subr.mxu0 0.0
        %1019 = vmatpush1.xpose.msra.mxu0 0.0
        %1020 = vmatprep.subr.mxu0 0.0
        %1021 = vmatpush1.xpose.msra.mxu0 0.0
        %1022 = vmatprep.subr.mxu0 0.0
        %1023 = vmatpush1.xpose.msra.mxu0 0.0
        %1024 = vmatprep.subr.mxu0 0.0
        %1025 = vmatpush1.xpose.msra.mxu0 0.0
        %1026 = vmatprep.subr.mxu0 0.0
        %1027 = vmatpush1.xpose.msra.mxu0 0.0
        %1028 = vmatprep.subr.mxu0 0.0
        %1029 = vmatpush1.xpose.msra.mxu0 0.0
        %1030 = vmatprep.subr.mxu0 0.0
        %1031 = vmatpush1.xpose.msra.mxu0 0.0
        %1032 = vmatprep.subr.mxu0 0.0
        %1033 = vmatpush1.xpose.msra.mxu0 0.0
        %1034 = vmatprep.subr.mxu0 0.0
        %1035 = vmatpush1.xpose.msra.mxu0 0.0
        %1036 = vmatprep.subr.mxu0 0.0
        %1037 = vmatpush1.xpose.msra.mxu0 0.0
        %1038 = vmatprep.subr.mxu0 0.0
        %1039 = vmatpush1.xpose.msra.mxu0 0.0
        %1040 = vmatprep.subr.mxu0 0.0
        %1041 = vmatpush1.xpose.msra.mxu0 0.0
        %1042 = vmatprep.subr.mxu0 0.0
        %1043 = vmatpush1.xpose.msra.mxu0 0.0
        %1044 = vmatprep.subr.mxu0 0.0
        %1045 = vmatpush1.xpose.msra.mxu0 0.0
        %1046 = vmatprep.subr.mxu0 0.0
        %1047 = vmatpush1.xpose.msra.mxu0 %v1014
        %1048 = vmatprep.subr.mxu0 0.0
        %1049 = vmatpush2.xpose.msra.mxu0 0.0
        %1050 = vmatprep.subr.mxu0 0.0
        %1051 = vmatpush2.xpose.msra.mxu0 0.0
        %1052 = vmatprep.subr.mxu0 0.0
        %1053 = vmatpush2.xpose.msra.mxu0 0.0
        %1054 = vmatprep.subr.mxu0 0.0
        %1055 = vmatpush2.xpose.msra.mxu0 0.0
        %1056 = vmatprep.subr.mxu0 0.0
        %1057 = vmatpush2.xpose.msra.mxu0 0.0
        %1058 = vmatprep.subr.mxu0 0.0
        %1059 = vmatpush2.xpose.msra.mxu0 0.0
        %1060 = vmatprep.subr.mxu0 0.0
        %1061 = vmatpush2.xpose.msra.mxu0 0.0
        %1062 = vmatprep.subr.mxu0 0.0
        %1063 = vmatpush2.xpose.msra.mxu0 0.0
        %1064 = vmatprep.subr.mxu0 0.0
        %1065 = vmatpush2.xpose.msra.mxu0 0.0
        %1066 = vmatprep.subr.mxu0 0.0
        %1067 = vmatpush2.xpose.msra.mxu0 0.0
        %1068 = vmatprep.subr.mxu0 0.0
        %1069 = vmatpush2.xpose.msra.mxu0 0.0
        %1070 = vmatprep.subr.mxu0 0.0
        %1071 = vmatpush2.xpose.msra.mxu0 0.0
        %1072 = vmatprep.subr.mxu0 0.0
        %1073 = vmatpush2.xpose.msra.mxu0 0.0
        %1074 = vmatprep.subr.mxu0 0.0
        %1075 = vmatpush2.xpose.msra.mxu0 0.0
        %1076 = vmatprep.subr.mxu0 0.0
        %1077 = vmatpush2.xpose.msra.mxu0 0.0
        %1078 = vmatprep.subr.mxu0 0.0
        %1079 = vmatpush2.xpose.msra.mxu0 0.0
        %1080 = vmatprep.mubr.f32.mxu0 0.0
        %1081 = vmatmul.mubr.f32.gmra.mxu0 %v1012
        %v1082 = vpop.f32.mrf.mxu0
        %v1083 = vadd.f32 %v678, %v1082
        %v1084 = vpop.f32.mrf.mxu0
        %1085 = vdwg.mxu0
        %v1086 = vsel %vm757, %v1083, -inf
        %1087 = vmax.xlane.f32.xlu0 %v1086
        %v1088 = vpop.xlane.xlu0 %1087
        %v1089 = vsub.f32 %v1083, %v1088
        %v1090 = vmul.f32 %v1089, 1.442695
        %v1091 = vpow.pop %v1090
        %v1092 = vsel %vm757, %v1091, 0.0
        %1093 = vadd.xlane.f32.xlu0 %v1092
        %v1094 = vpop.xlane.xlu0 %1093
        %v1095 = vrcp.pop %v1094
        %v1096 = vmul.f32 %v1091, %v1095
        %1097 = vrot.lane.b32.xlu0 %v669, 64
        %v1098 = vpop.permute.xlu0 %1097
        %v1101 = vsel %vm757, %v1096, 0
        %1103 = vmatprep.subr.mxu0 0.0
        %1104 = vmatpush1.msra.mxu0 0.0
        %1105 = vmatprep.subr.mxu0 0.0
        %1106 = vmatpush1.msra.mxu0 0.0
        %1107 = vmatprep.subr.mxu0 0.0
        %1108 = vmatpush1.msra.mxu0 0.0
        %1109 = vmatprep.subr.mxu0 0.0
        %1110 = vmatpush1.msra.mxu0 0.0
        %1111 = vmatprep.subr.mxu0 0.0
        %1112 = vmatpush1.msra.mxu0 0.0
        %1113 = vmatprep.subr.mxu0 0.0
        %1114 = vmatpush1.msra.mxu0 0.0
        %1115 = vmatprep.subr.mxu0 0.0
        %1116 = vmatpush1.msra.mxu0 0.0
        %1117 = vmatprep.subr.mxu0 0.0
        %1118 = vmatpush1.msra.mxu0 0.0
        %1119 = vmatprep.subr.mxu0 0.0
        %1120 = vmatpush1.msra.mxu0 0.0
        %1121 = vmatprep.subr.mxu0 0.0
        %1122 = vmatpush1.msra.mxu0 0.0
        %1123 = vmatprep.subr.mxu0 0.0
        %1124 = vmatpush1.msra.mxu0 0.0
        %1125 = vmatprep.subr.mxu0 0.0
        %1126 = vmatpush1.msra.mxu0 0.0
        %1127 = vmatprep.subr.mxu0 0.0
        %1128 = vmatpush1.msra.mxu0 0.0
        %1129 = vmatprep.subr.mxu0 0.0
        %1130 = vmatpush1.msra.mxu0 0.0
        %1131 = vmatprep.subr.mxu0 0.0
        %1132 = vmatpush1.msra.mxu0 0.0
        %1133 = vmatprep.subr.mxu0 0.0
        %1134 = vmatpush1.msra.mxu0 %v1098
        %1135 = vmatprep.subr.mxu0 0.0
        %1136 = vmatpush2.msra.mxu0 0.0
        %1137 = vmatprep.subr.mxu0 0.0
        %1138 = vmatpush2.msra.mxu0 0.0
        %1139 = vmatprep.subr.mxu0 0.0
        %1140 = vmatpush2.msra.mxu0 0.0
        %1141 = vmatprep.subr.mxu0 0.0
        %1142 = vmatpush2.msra.mxu0 0.0
        %1143 = vmatprep.subr.mxu0 0.0
        %1144 = vmatpush2.msra.mxu0 0.0
        %1145 = vmatprep.subr.mxu0 0.0
        %1146 = vmatpush2.msra.mxu0 0.0
        %1147 = vmatprep.subr.mxu0 0.0
        %1148 = vmatpush2.msra.mxu0 0.0
        %1149 = vmatprep.subr.mxu0 0.0
        %1150 = vmatpush2.msra.mxu0 0.0
        %1151 = vmatprep.subr.mxu0 0.0
        %1152 = vmatpush2.msra.mxu0 0.0
        %1153 = vmatprep.subr.mxu0 0.0
        %1154 = vmatpush2.msra.mxu0 0.0
        %1155 = vmatprep.subr.mxu0 0.0
        %1156 = vmatpush2.msra.mxu0 0.0
        %1157 = vmatprep.subr.mxu0 0.0
        %1158 = vmatpush2.msra.mxu0 0.0
        %1159 = vmatprep.subr.mxu0 0.0
        %1160 = vmatpush2.msra.mxu0 0.0
        %1161 = vmatprep.subr.mxu0 0.0
        %1162 = vmatpush2.msra.mxu0 0.0
        %1163 = vmatprep.subr.mxu0 0.0
        %1164 = vmatpush2.msra.mxu0 0.0
        %1165 = vmatprep.subr.mxu0 0.0
        %1166 = vmatpush2.msra.mxu0 0.0
        %1167 = vmatprep.mubr.f32.mxu0 0.0
        %1168 = vmatmul.mubr.f32.gmra.mxu0 %v1101
        %v1169 = vpop.f32.mrf.mxu0
        %v1170 = vadd.f32 0.0, %v1169
        %v1171 = vpop.f32.mrf.mxu0
        %1172 = vdwg.mxu0
        %1173 = vrot.lane.b32.xlu0 %v628, 32
        %v1174 = vpop.permute.xlu0 %1173
        %1175 = vrot.lane.b32.xlu0 %v630, 32
        %v1176 = vpop.permute.xlu0 %1175
        %v1177 = vsel %vm680, %v1174, 0
        %v1179 = vsel %vm680, %v1176, 0
        %1181 = vmatprep.subr.mxu0 0.0
        %1182 = vmatpush1.xpose.msra.mxu0 0.0
        %1183 = vmatprep.subr.mxu0 0.0
        %1184 = vmatpush1.xpose.msra.mxu0 0.0
        %1185 = vmatprep.subr.mxu0 0.0
        %1186 = vmatpush1.xpose.msra.mxu0 0.0
        %1187 = vmatprep.subr.mxu0 0.0
        %1188 = vmatpush1.xpose.msra.mxu0 0.0
        %1189 = vmatprep.subr.mxu0 0.0
        %1190 = vmatpush1.xpose.msra.mxu0 0.0
        %1191 = vmatprep.subr.mxu0 0.0
        %1192 = vmatpush1.xpose.msra.mxu0 0.0
        %1193 = vmatprep.subr.mxu0 0.0
        %1194 = vmatpush1.xpose.msra.mxu0 0.0
        %1195 = vmatprep.subr.mxu0 0.0
        %1196 = vmatpush1.xpose.msra.mxu0 0.0
        %1197 = vmatprep.subr.mxu0 0.0
        %1198 = vmatpush1.xpose.msra.mxu0 0.0
        %1199 = vmatprep.subr.mxu0 0.0
        %1200 = vmatpush1.xpose.msra.mxu0 0.0
        %1201 = vmatprep.subr.mxu0 0.0
        %1202 = vmatpush1.xpose.msra.mxu0 0.0
        %1203 = vmatprep.subr.mxu0 0.0
        %1204 = vmatpush1.xpose.msra.mxu0 0.0
        %1205 = vmatprep.subr.mxu0 0.0
        %1206 = vmatpush1.xpose.msra.mxu0 0.0
        %1207 = vmatprep.subr.mxu0 0.0
        %1208 = vmatpush1.xpose.msra.mxu0 0.0
        %1209 = vmatprep.subr.mxu0 0.0
        %1210 = vmatpush1.xpose.msra.mxu0 0.0
        %1211 = vmatprep.subr.mxu0 0.0
        %1212 = vmatpush1.xpose.msra.mxu0 %v1179
        %1213 = vmatprep.subr.mxu0 0.0
        %1214 = vmatpush2.xpose.msra.mxu0 0.0
        %1215 = vmatprep.subr.mxu0 0.0
        %1216 = vmatpush2.xpose.msra.mxu0 0.0
        %1217 = vmatprep.subr.mxu0 0.0
        %1218 = vmatpush2.xpose.msra.mxu0 0.0
        %1219 = vmatprep.subr.mxu0 0.0
        %1220 = vmatpush2.xpose.msra.mxu0 0.0
        %1221 = vmatprep.subr.mxu0 0.0
        %1222 = vmatpush2.xpose.msra.mxu0 0.0
        %1223 = vmatprep.subr.mxu0 0.0
        %1224 = vmatpush2.xpose.msra.mxu0 0.0
        %1225 = vmatprep.subr.mxu0 0.0
        %1226 = vmatpush2.xpose.msra.mxu0 0.0
        %1227 = vmatprep.subr.mxu0 0.0
        %1228 = vmatpush2.xpose.msra.mxu0 0.0
        %1229 = vmatprep.subr.mxu0 0.0
        %1230 = vmatpush2.xpose.msra.mxu0 0.0
        %1231 = vmatprep.subr.mxu0 0.0
        %1232 = vmatpush2.xpose.msra.mxu0 0.0
        %1233 = vmatprep.subr.mxu0 0.0
        %1234 = vmatpush2.xpose.msra.mxu0 0.0
        %1235 = vmatprep.subr.mxu0 0.0
        %1236 = vmatpush2.xpose.msra.mxu0 0.0
        %1237 = vmatprep.subr.mxu0 0.0
        %1238 = vmatpush2.xpose.msra.mxu0 0.0
        %1239 = vmatprep.subr.mxu0 0.0
        %1240 = vmatpush2.xpose.msra.mxu0 0.0
        %1241 = vmatprep.subr.mxu0 0.0
        %1242 = vmatpush2.xpose.msra.mxu0 0.0
        %1243 = vmatprep.subr.mxu0 0.0
        %1244 = vmatpush2.xpose.msra.mxu0 0.0
        %1245 = vmatprep.mubr.f32.mxu0 0.0
        %1246 = vmatmul.mubr.f32.gmra.mxu0 %v1177
        %v1247 = vpop.f32.mrf.mxu0
        %v1248 = vadd.f32 %v678, %v1247
        %v1249 = vpop.f32.mrf.mxu0
        %1250 = vdwg.mxu0
        %v1251 = vsel %vm757, %v1248, -inf
        %1252 = vmax.xlane.f32.xlu0 %v1251
        %v1253 = vpop.xlane.xlu0 %1252
        %v1254 = vsub.f32 %v1248, %v1253
        %v1255 = vmul.f32 %v1254, 1.442695
        %v1256 = vpow.pop %v1255
        %v1257 = vsel %vm757, %v1256, 0.0
        %1258 = vadd.xlane.f32.xlu0 %v1257
        %v1259 = vpop.xlane.xlu0 %1258
        %v1260 = vrcp.pop %v1259
        %v1261 = vmul.f32 %v1256, %v1260
        %1262 = vrot.lane.b32.xlu0 %v669, 32
        %v1263 = vpop.permute.xlu0 %1262
        %v1266 = vsel %vm757, %v1261, 0
        %1268 = vmatprep.subr.mxu0 0.0
        %1269 = vmatpush1.msra.mxu0 0.0
        %1270 = vmatprep.subr.mxu0 0.0
        %1271 = vmatpush1.msra.mxu0 0.0
        %1272 = vmatprep.subr.mxu0 0.0
        %1273 = vmatpush1.msra.mxu0 0.0
        %1274 = vmatprep.subr.mxu0 0.0
        %1275 = vmatpush1.msra.mxu0 0.0
        %1276 = vmatprep.subr.mxu0 0.0
        %1277 = vmatpush1.msra.mxu0 0.0
        %1278 = vmatprep.subr.mxu0 0.0
        %1279 = vmatpush1.msra.mxu0 0.0
        %1280 = vmatprep.subr.mxu0 0.0
        %1281 = vmatpush1.msra.mxu0 0.0
        %1282 = vmatprep.subr.mxu0 0.0
        %1283 = vmatpush1.msra.mxu0 0.0
        %1284 = vmatprep.subr.mxu0 0.0
        %1285 = vmatpush1.msra.mxu0 0.0
        %1286 = vmatprep.subr.mxu0 0.0
        %1287 = vmatpush1.msra.mxu0 0.0
        %1288 = vmatprep.subr.mxu0 0.0
        %1289 = vmatpush1.msra.mxu0 0.0
        %1290 = vmatprep.subr.mxu0 0.0
        %1291 = vmatpush1.msra.mxu0 0.0
        %1292 = vmatprep.subr.mxu0 0.0
        %1293 = vmatpush1.msra.mxu0 0.0
        %1294 = vmatprep.subr.mxu0 0.0
        %1295 = vmatpush1.msra.mxu0 0.0
        %1296 = vmatprep.subr.mxu0 0.0
        %1297 = vmatpush1.msra.mxu0 0.0
        %1298 = vmatprep.subr.mxu0 0.0
        %1299 = vmatpush1.msra.mxu0 %v1263
        %1300 = vmatprep.subr.mxu0 0.0
        %1301 = vmatpush2.msra.mxu0 0.0
        %1302 = vmatprep.subr.mxu0 0.0
        %1303 = vmatpush2.msra.mxu0 0.0
        %1304 = vmatprep.subr.mxu0 0.0
        %1305 = vmatpush2.msra.mxu0 0.0
        %1306 = vmatprep.subr.mxu0 0.0
        %1307 = vmatpush2.msra.mxu0 0.0
        %1308 = vmatprep.subr.mxu0 0.0
        %1309 = vmatpush2.msra.mxu0 0.0
        %1310 = vmatprep.subr.mxu0 0.0
        %1311 = vmatpush2.msra.mxu0 0.0
        %1312 = vmatprep.subr.mxu0 0.0
        %1313 = vmatpush2.msra.mxu0 0.0
        %1314 = vmatprep.subr.mxu0 0.0
        %1315 = vmatpush2.msra.mxu0 0.0
        %1316 = vmatprep.subr.mxu0 0.0
        %1317 = vmatpush2.msra.mxu0 0.0
        %1318 = vmatprep.subr.mxu0 0.0
        %1319 = vmatpush2.msra.mxu0 0.0
        %1320 = vmatprep.subr.mxu0 0.0
        %1321 = vmatpush2.msra.mxu0 0.0
        %1322 = vmatprep.subr.mxu0 0.0
        %1323 = vmatpush2.msra.mxu0 0.0
        %1324 = vmatprep.subr.mxu0 0.0
        %1325 = vmatpush2.msra.mxu0 0.0
        %1326 = vmatprep.subr.mxu0 0.0
        %1327 = vmatpush2.msra.mxu0 0.0
        %1328 = vmatprep.subr.mxu0 0.0
        %1329 = vmatpush2.msra.mxu0 0.0
        %1330 = vmatprep.subr.mxu0 0.0
        %1331 = vmatpush2.msra.mxu0 0.0
        %1332 = vmatprep.mubr.f32.mxu0 0.0
        %1333 = vmatmul.mubr.f32.gmra.mxu0 %v1266
        %v1334 = vpop.f32.mrf.mxu0
        %v1335 = vadd.f32 0.0, %v1334
        %v1336 = vpop.f32.mrf.mxu0
        %1337 = vdwg.mxu0
        %1339 = vrot.lane.b32.xlu0 %v1005, 32
        %v1340 = vpop.permute.xlu0 %1339
        %1343 = vrot.lane.b32.xlu0 %v1170, 64
        %v1344 = vpop.permute.xlu0 %1343
        %1347 = vrot.lane.b32.xlu0 %v1335, 96
        %v1348 = vpop.permute.xlu0 %1347
        %v1350 = vsel %vm680, %v839, %v1340
        %vm1351 = vcmask 523264
        %v1352 = vsel %vm1351, %v1350, %v1344
        %vm1353 = vcmask 785408
        %v1354 = vsel %vm1353, %v1352, %v1348
        %v1355 = vpack.c.bf16 %v1354, %v1354
        %v1356 = vld [vmem:[#allocation8] sm:$0xf]
        %v1357 = vld [vmem:[#allocation8 + $0x4] sm:$0xf]
        %v1358 = vld [vmem:[#allocation8 + $0x8] sm:$0xf]
        %v1359 = vld [vmem:[#allocation8 + $0xc] sm:$0xf]
        %v1360 = vld [vmem:[#allocation8 + $0x10] sm:$0xf]
        %v1361 = vld [vmem:[#allocation8 + $0x14] sm:$0xf]
        %v1362 = vld [vmem:[#allocation8 + $0x18] sm:$0xf]
        %v1363 = vld [vmem:[#allocation8 + $0x1c] sm:$0xf]
        %v1364 = vld [vmem:[#allocation8 + $0x20] sm:$0xf]
        %v1365 = vld [vmem:[#allocation8 + $0x24] sm:$0xf]
        %v1366 = vld [vmem:[#allocation8 + $0x28] sm:$0xf]
        %v1367 = vld [vmem:[#allocation8 + $0x2c] sm:$0xf]
        %v1368 = vld [vmem:[#allocation8 + $0x30] sm:$0xf]
        %v1369 = vld [vmem:[#allocation8 + $0x34] sm:$0xf]
        %v1370 = vld [vmem:[#allocation8 + $0x38] sm:$0xf]
        %v1371 = vld [vmem:[#allocation8 + $0x3c] sm:$0xf]
        %v1388 = vunpack.c.l.b16 %v1356
        %v1389 = vunpack.c.l.b16 %v1357
        %v1390 = vunpack.c.l.b16 %v1358
        %v1391 = vunpack.c.l.b16 %v1359
        %v1392 = vunpack.c.l.b16 %v1360
        %v1393 = vunpack.c.l.b16 %v1361
        %v1394 = vunpack.c.l.b16 %v1362
        %v1395 = vunpack.c.l.b16 %v1363
        %v1396 = vunpack.c.l.b16 %v1364
        %v1397 = vunpack.c.l.b16 %v1365
        %v1398 = vunpack.c.l.b16 %v1366
        %v1399 = vunpack.c.l.b16 %v1367
        %v1400 = vunpack.c.l.b16 %v1368
        %v1401 = vunpack.c.l.b16 %v1369
        %v1402 = vunpack.c.l.b16 %v1370
        %v1403 = vunpack.c.l.b16 %v1371
        %v1404 = vpack.c.b16 %v1389, %v1388
        %v1405 = vpack.c.b16 %v1391, %v1390
        %v1406 = vpack.c.b16 %v1393, %v1392
        %v1407 = vpack.c.b16 %v1395, %v1394
        %v1408 = vpack.c.b16 %v1397, %v1396
        %v1409 = vpack.c.b16 %v1399, %v1398
        %v1410 = vpack.c.b16 %v1401, %v1400
        %v1411 = vpack.c.b16 %v1403, %v1402
        %1420 = vmatprep.subr.bf16.mxu0 0
        %1421 = vmatpush1.bf16.msra.mxu0 %v1411
        %1422 = vmatprep.subr.bf16.mxu0 0
        %1423 = vmatpush1.bf16.msra.mxu0 %v1410
        %1424 = vmatprep.subr.bf16.mxu0 0
        %1425 = vmatpush1.bf16.msra.mxu0 %v1409
        %1426 = vmatprep.subr.bf16.mxu0 0
        %1427 = vmatpush1.bf16.msra.mxu0 %v1408
        %1428 = vmatprep.subr.bf16.mxu0 0
        %1429 = vmatpush1.bf16.msra.mxu0 %v1407
        %1430 = vmatprep.subr.bf16.mxu0 0
        %1431 = vmatpush1.bf16.msra.mxu0 %v1406
        %1432 = vmatprep.subr.bf16.mxu0 0
        %1433 = vmatpush1.bf16.msra.mxu0 %v1405
        %1434 = vmatprep.subr.bf16.mxu0 0
        %1435 = vmatpush1.bf16.msra.mxu0 %v1404
        %1436 = vmatprep.subr.bf16.mxu0 0
        %1437 = vmatpush2.bf16.msra.mxu0 0
        %1438 = vmatprep.subr.bf16.mxu0 0
        %1439 = vmatpush2.bf16.msra.mxu0 0
        %1440 = vmatprep.subr.bf16.mxu0 0
        %1441 = vmatpush2.bf16.msra.mxu0 0
        %1442 = vmatprep.subr.bf16.mxu0 0
        %1443 = vmatpush2.bf16.msra.mxu0 0
        %1444 = vmatprep.subr.bf16.mxu0 0
        %1445 = vmatpush2.bf16.msra.mxu0 0
        %1446 = vmatprep.subr.bf16.mxu0 0
        %1447 = vmatpush2.bf16.msra.mxu0 0
        %1448 = vmatprep.subr.bf16.mxu0 0
        %1449 = vmatpush2.bf16.msra.mxu0 0
        %1450 = vmatprep.subr.bf16.mxu0 0
        %1451 = vmatpush2.bf16.msra.mxu0 0
        %1452 = vmatprep.mubr.bf16.mxu0 0
        %1453 = vmatmul.mubr.bf16.gmra.mxu0 %v1355
        %v1454 = vpop.f32.mrf.mxu0
        %v1455 = vadd.f32 0.0, %v1454
        %v1456 = vpop.f32.mrf.mxu0
        %v1457 = vpop.f32.mrf.mxu0
        %v1458 = vpop.f32.mrf.mxu0
        %1459 = vdwg.mxu0
        %v1460 = vadd.f32 %v414, %v1455
        %v1461 = vmul.f32 %v1460, %v1460
        %1462 = vadd.xlane.f32.xlu0 %v1461
        %v1463 = vpop.xlane.xlu0 %1462
        %v1464 = vmul.f32 %v1463, %v419
        %v1465 = vadd.f32 %v1464, 1e-06
        %v1466 = vrsqrt.pop %v1465
        %v1467 = vmul.f32 %v1460, %v1466
        %v1468 = vld [vmem:[%s5] sm:$0x1]
        %v1470 = vlaneseq
        %v1471 = vshrl.u32 %v1470, 7
        %v1472 = vsub.s32 0, %v1471
        %v1473 = vrot.slane %v1468, %v1472
        %v1475 = vmul.f32 %v1467, %v1473
        %v1476 = vpack.c.bf16 %v1475, %v1475
        %v1477 = vld [vmem:[#allocation10] sm:$0xff]
        %v1478 = vld [vmem:[#allocation10 + $0x8] sm:$0xff]
        %v1479 = vld [vmem:[#allocation10 + $0x10] sm:$0xff]
        %v1480 = vld [vmem:[#allocation10 + $0x18] sm:$0xff]
        %v1481 = vld [vmem:[#allocation10 + $0x20] sm:$0xff]
        %v1482 = vld [vmem:[#allocation10 + $0x28] sm:$0xff]
        %v1483 = vld [vmem:[#allocation10 + $0x30] sm:$0xff]
        %v1484 = vld [vmem:[#allocation10 + $0x38] sm:$0xff]
        %v1485 = vld [vmem:[#allocation10 + $0x40] sm:$0xff]
        %v1486 = vld [vmem:[#allocation10 + $0x48] sm:$0xff]
        %v1487 = vld [vmem:[#allocation10 + $0x50] sm:$0xff]
        %v1488 = vld [vmem:[#allocation10 + $0x58] sm:$0xff]
        %v1489 = vld [vmem:[#allocation10 + $0x60] sm:$0xff]
        %v1490 = vld [vmem:[#allocation10 + $0x68] sm:$0xff]
        %v1491 = vld [vmem:[#allocation10 + $0x70] sm:$0xff]
        %v1492 = vld [vmem:[#allocation10 + $0x78] sm:$0xff]
        %v1509 = vunpack.c.l.b16 %v1477
        %v1510 = vunpack.c.h.b16 %v1477
        %v1511 = vunpack.c.l.b16 %v1478
        %v1512 = vunpack.c.h.b16 %v1478
        %v1513 = vunpack.c.l.b16 %v1479
        %v1514 = vunpack.c.h.b16 %v1479
        %v1515 = vunpack.c.l.b16 %v1480
        %v1516 = vunpack.c.h.b16 %v1480
        %v1517 = vunpack.c.l.b16 %v1481
        %v1518 = vunpack.c.h.b16 %v1481
        %v1519 = vunpack.c.l.b16 %v1482
        %v1520 = vunpack.c.h.b16 %v1482
        %v1521 = vunpack.c.l.b16 %v1483
        %v1522 = vunpack.c.h.b16 %v1483
        %v1523 = vunpack.c.l.b16 %v1484
        %v1524 = vunpack.c.h.b16 %v1484
        %v1525 = vunpack.c.l.b16 %v1485
        %v1526 = vunpack.c.h.b16 %v1485
        %v1527 = vunpack.c.l.b16 %v1486
        %v1528 = vunpack.c.h.b16 %v1486
        %v1529 = vunpack.c.l.b16 %v1487
        %v1530 = vunpack.c.h.b16 %v1487
        %v1531 = vunpack.c.l.b16 %v1488
        %v1532 = vunpack.c.h.b16 %v1488
        %v1533 = vunpack.c.l.b16 %v1489
        %v1534 = vunpack.c.h.b16 %v1489
        %v1535 = vunpack.c.l.b16 %v1490
        %v1536 = vunpack.c.h.b16 %v1490
        %v1537 = vunpack.c.l.b16 %v1491
        %v1538 = vunpack.c.h.b16 %v1491
        %v1539 = vunpack.c.l.b16 %v1492
        %v1540 = vunpack.c.h.b16 %v1492
        %v1541 = vpack.c.b16 %v1511, %v1509
        %v1542 = vpack.c.b16 %v1512, %v1510
        %v1543 = vpack.c.b16 %v1515, %v1513
        %v1544 = vpack.c.b16 %v1516, %v1514
        %v1545 = vpack.c.b16 %v1519, %v1517
        %v1546 = vpack.c.b16 %v1520, %v1518
        %v1547 = vpack.c.b16 %v1523, %v1521
        %v1548 = vpack.c.b16 %v1524, %v1522
        %v1549 = vpack.c.b16 %v1527, %v1525
        %v1550 = vpack.c.b16 %v1528, %v1526
        %v1551 = vpack.c.b16 %v1531, %v1529
        %v1552 = vpack.c.b16 %v1532, %v1530
        %v1553 = vpack.c.b16 %v1535, %v1533
        %v1554 = vpack.c.b16 %v1536, %v1534
        %v1555 = vpack.c.b16 %v1539, %v1537
        %v1556 = vpack.c.b16 %v1540, %v1538
        %1573 = vmatprep.subr.bf16.mxu0 %v1556
        %1574 = vmatpush1.bf16.msra.mxu0 %v1555
        %1575 = vmatprep.subr.bf16.mxu0 %v1554
        %1576 = vmatpush1.bf16.msra.mxu0 %v1553
        %1577 = vmatprep.subr.bf16.mxu0 %v1552
        %1578 = vmatpush1.bf16.msra.mxu0 %v1551
        %1579 = vmatprep.subr.bf16.mxu0 %v1550
        %1580 = vmatpush1.bf16.msra.mxu0 %v1549
        %1581 = vmatprep.subr.bf16.mxu0 %v1548
        %1582 = vmatpush1.bf16.msra.mxu0 %v1547
        %1583 = vmatprep.subr.bf16.mxu0 %v1546
        %1584 = vmatpush1.bf16.msra.mxu0 %v1545
        %1585 = vmatprep.subr.bf16.mxu0 %v1544
        %1586 = vmatpush1.bf16.msra.mxu0 %v1543
        %1587 = vmatprep.subr.bf16.mxu0 %v1542
        %1588 = vmatpush1.bf16.msra.mxu0 %v1541
        %1589 = vmatprep.subr.bf16.mxu0 0
        %1590 = vmatpush2.bf16.msra.mxu0 0
        %1591 = vmatprep.subr.bf16.mxu0 0
        %1592 = vmatpush2.bf16.msra.mxu0 0
        %1593 = vmatprep.subr.bf16.mxu0 0
        %1594 = vmatpush2.bf16.msra.mxu0 0
        %1595 = vmatprep.subr.bf16.mxu0 0
        %1596 = vmatpush2.bf16.msra.mxu0 0
        %1597 = vmatprep.subr.bf16.mxu0 0
        %1598 = vmatpush2.bf16.msra.mxu0 0
        %1599 = vmatprep.subr.bf16.mxu0 0
        %1600 = vmatpush2.bf16.msra.mxu0 0
        %1601 = vmatprep.subr.bf16.mxu0 0
        %1602 = vmatpush2.bf16.msra.mxu0 0
        %1603 = vmatprep.subr.bf16.mxu0 0
        %1604 = vmatpush2.bf16.msra.mxu0 0
        %1605 = vmatprep.mubr.bf16.mxu0 0
        %1606 = vmatmul.mubr.bf16.gmra.mxu0 %v1476
        %v1607 = vpop.f32.mrf.mxu0
        %v1608 = vadd.f32 0.0, %v1607
        %v1609 = vpop.f32.mrf.mxu0
        %v1610 = vadd.f32 0.0, %v1609
        %v1611 = vpop.f32.mrf.mxu0
        %v1612 = vpop.f32.mrf.mxu0
        %1613 = vdwg.mxu0
        %v1614 = vmax.f32 %v1608, 0.0
        %v1615 = vmax.f32 %v1610, 0.0
        %v1616 = vpack.c.bf16 %v1614, %v1614
        %v1617 = vpack.c.bf16 %v1615, %v1615
        %v1618 = vld [vmem:[#allocation11] sm:$0xf]
        %v1619 = vld [vmem:[#allocation11 + $0x4] sm:$0xf]
        %v1620 = vld [vmem:[#allocation11 + $0x8] sm:$0xf]
        %v1621 = vld [vmem:[#allocation11 + $0xc] sm:$0xf]
        %v1622 = vld [vmem:[#allocation11 + $0x10] sm:$0xf]
        %v1623 = vld [vmem:[#allocation11 + $0x14] sm:$0xf]
        %v1624 = vld [vmem:[#allocation11 + $0x18] sm:$0xf]
        %v1625 = vld [vmem:[#allocation11 + $0x1c] sm:$0xf]
        %v1626 = vld [vmem:[#allocation11 + $0x20] sm:$0xf]
        %v1627 = vld [vmem:[#allocation11 + $0x24] sm:$0xf]
        %v1628 = vld [vmem:[#allocation11 + $0x28] sm:$0xf]
        %v1629 = vld [vmem:[#allocation11 + $0x2c] sm:$0xf]
        %v1630 = vld [vmem:[#allocation11 + $0x30] sm:$0xf]
        %v1631 = vld [vmem:[#allocation11 + $0x34] sm:$0xf]
        %v1632 = vld [vmem:[#allocation11 + $0x38] sm:$0xf]
        %v1633 = vld [vmem:[#allocation11 + $0x3c] sm:$0xf]
        %v1634 = vld [vmem:[#allocation11 + $0x40] sm:$0xf]
        %v1635 = vld [vmem:[#allocation11 + $0x44] sm:$0xf]
        %v1636 = vld [vmem:[#allocation11 + $0x48] sm:$0xf]
        %v1637 = vld [vmem:[#allocation11 + $0x4c] sm:$0xf]
        %v1638 = vld [vmem:[#allocation11 + $0x50] sm:$0xf]
        %v1639 = vld [vmem:[#allocation11 + $0x54] sm:$0xf]
        %v1640 = vld [vmem:[#allocation11 + $0x58] sm:$0xf]
        %v1641 = vld [vmem:[#allocation11 + $0x5c] sm:$0xf]
        %v1642 = vld [vmem:[#allocation11 + $0x60] sm:$0xf]
        %v1643 = vld [vmem:[#allocation11 + $0x64] sm:$0xf]
        %v1644 = vld [vmem:[#allocation11 + $0x68] sm:$0xf]
        %v1645 = vld [vmem:[#allocation11 + $0x6c] sm:$0xf]
        %v1646 = vld [vmem:[#allocation11 + $0x70] sm:$0xf]
        %v1647 = vld [vmem:[#allocation11 + $0x74] sm:$0xf]
        %v1648 = vld [vmem:[#allocation11 + $0x78] sm:$0xf]
        %v1649 = vld [vmem:[#allocation11 + $0x7c] sm:$0xf]
        %v1682 = vunpack.c.l.b16 %v1618
        %v1683 = vunpack.c.l.b16 %v1619
        %v1684 = vunpack.c.l.b16 %v1620
        %v1685 = vunpack.c.l.b16 %v1621
        %v1686 = vunpack.c.l.b16 %v1622
        %v1687 = vunpack.c.l.b16 %v1623
        %v1688 = vunpack.c.l.b16 %v1624
        %v1689 = vunpack.c.l.b16 %v1625
        %v1690 = vunpack.c.l.b16 %v1626
        %v1691 = vunpack.c.l.b16 %v1627
        %v1692 = vunpack.c.l.b16 %v1628
        %v1693 = vunpack.c.l.b16 %v1629
        %v1694 = vunpack.c.l.b16 %v1630
        %v1695 = vunpack.c.l.b16 %v1631
        %v1696 = vunpack.c.l.b16 %v1632
        %v1697 = vunpack.c.l.b16 %v1633
        %v1698 = vunpack.c.l.b16 %v1634
        %v1699 = vunpack.c.l.b16 %v1635
        %v1700 = vunpack.c.l.b16 %v1636
        %v1701 = vunpack.c.l.b16 %v1637
        %v1702 = vunpack.c.l.b16 %v1638
        %v1703 = vunpack.c.l.b16 %v1639
        %v1704 = vunpack.c.l.b16 %v1640
        %v1705 = vunpack.c.l.b16 %v1641
        %v1706 = vunpack.c.l.b16 %v1642
        %v1707 = vunpack.c.l.b16 %v1643
        %v1708 = vunpack.c.l.b16 %v1644
        %v1709 = vunpack.c.l.b16 %v1645
        %v1710 = vunpack.c.l.b16 %v1646
        %v1711 = vunpack.c.l.b16 %v1647
        %v1712 = vunpack.c.l.b16 %v1648
        %v1713 = vunpack.c.l.b16 %v1649
        %v1714 = vpack.c.b16 %v1683, %v1682
        %v1715 = vpack.c.b16 %v1685, %v1684
        %v1716 = vpack.c.b16 %v1687, %v1686
        %v1717 = vpack.c.b16 %v1689, %v1688
        %v1718 = vpack.c.b16 %v1691, %v1690
        %v1719 = vpack.c.b16 %v1693, %v1692
        %v1720 = vpack.c.b16 %v1695, %v1694
        %v1721 = vpack.c.b16 %v1697, %v1696
        %v1722 = vpack.c.b16 %v1699, %v1698
        %v1723 = vpack.c.b16 %v1701, %v1700
        %v1724 = vpack.c.b16 %v1703, %v1702
        %v1725 = vpack.c.b16 %v1705, %v1704
        %v1726 = vpack.c.b16 %v1707, %v1706
        %v1727 = vpack.c.b16 %v1709, %v1708
        %v1728 = vpack.c.b16 %v1711, %v1710
        %v1729 = vpack.c.b16 %v1713, %v1712
        %1746 = vmatprep.subr.bf16.mxu0 0
        %1747 = vmatpush1.bf16.msra.mxu0 %v1721
        %1748 = vmatprep.subr.bf16.mxu0 0
        %1749 = vmatpush1.bf16.msra.mxu0 %v1720
        %1750 = vmatprep.subr.bf16.mxu0 0
        %1751 = vmatpush1.bf16.msra.mxu0 %v1719
        %1752 = vmatprep.subr.bf16.mxu0 0
        %1753 = vmatpush1.bf16.msra.mxu0 %v1718
        %1754 = vmatprep.subr.bf16.mxu0 0
        %1755 = vmatpush1.bf16.msra.mxu0 %v1717
        %1756 = vmatprep.subr.bf16.mxu0 0
        %1757 = vmatpush1.bf16.msra.mxu0 %v1716
        %1758 = vmatprep.subr.bf16.mxu0 0
        %1759 = vmatpush1.bf16.msra.mxu0 %v1715
        %1760 = vmatprep.subr.bf16.mxu0 0
        %1761 = vmatpush1.bf16.msra.mxu0 %v1714
        %1762 = vmatprep.subr.bf16.mxu0 0
        %1763 = vmatpush2.bf16.msra.mxu0 %v1729
        %1764 = vmatprep.subr.bf16.mxu0 0
        %1765 = vmatpush2.bf16.msra.mxu0 %v1728
        %1766 = vmatprep.subr.bf16.mxu0 0
        %1767 = vmatpush2.bf16.msra.mxu0 %v1727
        %1768 = vmatprep.subr.bf16.mxu0 0
        %1769 = vmatpush2.bf16.msra.mxu0 %v1726
        %1770 = vmatprep.subr.bf16.mxu0 0
        %1771 = vmatpush2.bf16.msra.mxu0 %v1725
        %1772 = vmatprep.subr.bf16.mxu0 0
        %1773 = vmatpush2.bf16.msra.mxu0 %v1724
        %1774 = vmatprep.subr.bf16.mxu0 0
        %1775 = vmatpush2.bf16.msra.mxu0 %v1723
        %1776 = vmatprep.subr.bf16.mxu0 0
        %1777 = vmatpush2.bf16.msra.mxu0 %v1722
        %1778 = vmatprep.mubr.bf16.mxu0 %v1617
        %1779 = vmatmul.mubr.bf16.gmra.mxu0 %v1616
        %v1780 = vpop.f32.mrf.mxu0
        %v1781 = vadd.f32 0.0, %v1780
        %v1782 = vpop.f32.mrf.mxu0
        %v1783 = vpop.f32.mrf.mxu0
        %v1784 = vpop.f32.mrf.mxu0
        %1785 = vdwg.mxu0
        %v1786 = vadd.f32 %v1460, %v1781
        %1787 = vst [vmem:[%s412] sm:$0xff] %v1786
        %s1788 = sand.u32 %s216, 1
        %s1789 = scalar_lea.sflag [#allocation4], %s1788
        %s1790 = sand.u32 %s216, 1
        %s1791 = smul.addr %s1790, 8
        %s1792 = scalar_lea.vmem [#allocation13], %s1791
        // Predicated region
        $region77: #{tpu_custom_call.1} parent=51 // pred_check
          %p1793 = pneg %p226
        $region78: #{tpu_custom_call.1} parent=51 // pred_check_branch
          %1795 = sbr.rel (%p1793) target = $region80
        $region79: #{tpu_custom_call.1} parent=51 // pred_region
          %s1797 = ssub.s32 128, 128
          %1798 = vsyncadd %s1789, %s1797
          %s1799 = smul.addr %s30, 128
          %s1800 = scalar_lea.hbm %s8, %s1799
          %s1802 = sshll.u32 %s1792, 4
          %s1803 = int_to_ptr.vmem [resolvable:$true] %s1802
          %1805 = dma.vmem_to_hbm [thread:$0]  %s1803, 128, %s1800, %s1789
        $region80: #{tpu_custom_call.1} parent=51 // pred_fallthru
          _
      $region52: #{tpu_custom_call.1} parent=5 // pred_fallthru
        _
      %p1806 = scmp.le.s32.totalorder 2, %s25
      // Predicated region
      $region81: #{tpu_custom_call.1} parent=5 // pred_check
        %p1807 = pneg %p1806
      $region82: #{tpu_custom_call.1} parent=5 // pred_check_branch
        %1809 = sbr.rel (%p1807) target = $region84
      $region83: #{tpu_custom_call.1} parent=5 // pred_region
        %s1810 = ssub.s32 %s25, 2
        // Predicated region
        $region85: #{tpu_custom_call.1} parent=83 // pred_check
          %p1811 = pneg %p232
        $region86: #{tpu_custom_call.1} parent=83 // pred_check_branch
          %1813 = sbr.rel (%p1811) target = $region88
        $region87: #{tpu_custom_call.1} parent=83 // pred_region
          %s1814 = sand.u32 %s217, 1
          %s1815 = scalar_lea.sflag [#allocation4], %s1814
          %s1816 = sand.u32 %s217, 1
          %s1817 = smul.addr %s1816, 8
          %s1818 = scalar_lea.vmem [#allocation13], %s1817
          %1819 = dma.done %s1815, 128
        $region88: #{tpu_custom_call.1} parent=83 // pred_fallthru
          _
      $region84: #{tpu_custom_call.1} parent=5 // pred_fallthru
        _
    $region6: #{tpu_custom_call.1} parent=1 // loop_footer
      %s29 = sadd.s32 1, %s25
    $region7: #{tpu_custom_call.1} parent=1 // loop_footer_branch
      %24 = sbr.rel target = $region3
    $region8: #{tpu_custom_call.1} parent=1 // loop_exit
      _
    %1820 = vsyncpa [#allocation3], 1
    %s1821 = scalar_lea.sflag [#allocation3], 1
    %1822 = vsyncpa %s1821, 1
    %1823 = vsyncpa [#allocation6], 1
    %s1824 = scalar_lea.sflag [#allocation6], 1
    %1825 = vsyncpa %s1824, 1
    %1826 = vsyncpa [#allocation9], 1
    %1827 = vsyncpa [#allocation12], 1
    %1828 = vsyncpa [#allocation4], 1
    %s1829 = scalar_lea.sflag [#allocation4], 1
    %1830 = vsyncpa %s1829, 1

</llo_original>
